<compile_context>
chip_gen: v7x
topology: tpu7x:2x2x1
jax: 0.10.0
libtpu: 0.0.40
codegen_flags: <defaults>
</compile_context>

<pallas_src>
import functools

import jax
import jax.numpy as jnp
import numpy as np
from jax import lax
from jax.experimental import pallas as pl
from jax.experimental.pallas import tpu as pltpu

C_PAD = 128                       # pad channel dims to the 128-lane width
HALO = 8                          # sublane-aligned zero halo (>= conv pad)
VMEM_BUDGET_BYTES = 14 * 1024 * 1024      # accounted per-step budget (~half scoped limit)
VMEM_LIMIT_BYTES = 32 * 1024 * 1024       # requested scoped VMEM limit
ROWS_PER_BLOCK_TARGET = 2048              # target NB*L matmul rows per grid step


def _encoder_fused_kernel(x_ref, w_ref, b_ref, o_ref, act_ref, *,
                          num_layers, K, pad, L):
    """All encoder layers fused; activations stay in VMEM scratch.

    x_ref  : (NB, L, C_PAD)            bf16 input block (channels zero-padded)
    w_ref  : (num_layers, K, C_PAD, C_PAD) bf16 per-tap weights (zero-padded)
    b_ref  : (num_layers, 1, C_PAD)    f32 bias (zero-padded)
    o_ref  : (NB, L, C_PAD)            bf16 last-layer output (lane-dense)
    act_ref: (NB, HALO + L + HALO, C_PAD) f32 scratch; halo rows give the
                                       zero "same" padding for every layer
    """
    NB = x_ref.shape[0]
    C = x_ref.shape[2]
    Lp = act_ref.shape[1]

    # Zero only the halo rows (the interior is fully overwritten below and the
    # halos are never written by the layer loop, so they stay zero).
    act_ref[:, :HALO, :] = jnp.zeros((NB, HALO, C), act_ref.dtype)
    act_ref[:, HALO + L:, :] = jnp.zeros((NB, Lp - HALO - L, C), act_ref.dtype)
    act_ref[:, HALO:HALO + L, :] = x_ref[...].astype(act_ref.dtype)

    for layer in range(num_layers):            # statically unrolled
        xp = act_ref[...]                      # (NB, Lp, C) f32
        acc = None
        for k in range(K):                     # K accumulated 128-deep matmuls
            shift = (pad - k) % Lp
            xs = pltpu.roll(xp, shift, 1) if shift else xp   # sublane roll (XLU)
            lhs = xs[:, HALO:HALO + L, :].reshape(NB * L, C).astype(jnp.bfloat16)
            part = jnp.dot(lhs, w_ref[layer, k],
                           preferred_element_type=jnp.float32)
            acc = part if acc is None else acc + part
        y = jnp.maximum(acc + b_ref[layer], 0.0)             # bias + ReLU epilogue
        y = y.reshape(NB, L, C)
        if layer + 1 < num_layers:
            act_ref[:, HALO:HALO + L, :] = y   # halo rows stay zero for next layer
        else:
            o_ref[...] = y.astype(o_ref.dtype)


def _pack_params(params):
    """Stack & zero-pad all layer weights/biases to C_PAD-wide per-tap form."""
    w_blocks, b_blocks = [], []
    for (w, b) in params:                      # w: (Cout, Cin, K)  [PyTorch layout]
        Cout, Cin, _ = w.shape
        w_kic = jnp.transpose(w, (2, 1, 0))    # (K, Cin, Cout)
        w_kic = jnp.pad(w_kic, ((0, 0), (0, C_PAD - Cin), (0, C_PAD - Cout)))
        w_blocks.append(w_kic.astype(jnp.bfloat16))
        b_blocks.append(jnp.pad(b, (0, C_PAD - Cout)).reshape(1, C_PAD)
                        .astype(jnp.float32))
    return jnp.stack(w_blocks), jnp.stack(b_blocks)


def _choose_batch_block(N, L, num_layers, K):
    """Pick the batch block size NB from a VMEM budget + pipelining targets."""
    Lp = L + 2 * HALO
    per_n = (2 * L * C_PAD * 2        # bf16 input block, double-buffered
             + 2 * L * C_PAD * 2      # bf16 output block, double-buffered
             + Lp * C_PAD * 4         # f32 activation scratch
             + Lp * C_PAD * 4         # rolled-copy temporary
             + L * C_PAD * (2 + 4))   # bf16 matmul operand + f32 accumulator
    fixed = 2 * num_layers * (K * C_PAD * C_PAD * 2 + C_PAD * 4)  # weights+bias
    nb_vmem = max(1, (VMEM_BUDGET_BYTES - fixed) // per_n)
    nb_rows = max(1, ROWS_PER_BLOCK_TARGET // max(1, L))
    target_blocks = max(1, min(8, N))          # >= 8 blocks (>=4/TC on v7x) if possible
    nb_split = max(1, pl.cdiv(N, target_blocks))
    nb = int(max(1, min(nb_vmem, nb_rows, nb_split)))
    num_blocks = int(pl.cdiv(N, nb))
    return nb, num_blocks


def encoder_forward(params, x_ncl):
    """EncoderNet.forward: x (N, C_in, L) -> (N, latent_dim, L). activation = ReLU."""
    N, C_in, L = x_ncl.shape
    K = params[0][0].shape[2]
    assert K % 2 == 1, "kernel_size must be odd to match PyTorch 'same' padding"
    pad = (K - 1) // 2
    assert pad <= HALO
    num_layers = len(params)
    latent_dim = params[-1][0].shape[0]

    NB, num_blocks = _choose_batch_block(N, L, num_layers, K)
    N_pad = NB * num_blocks

    # NCW -> NLC, bf16 (matmul dtype), zero-pad channels to the lane width.
    x_nlc = jnp.transpose(x_ncl, (0, 2, 1)).astype(jnp.bfloat16)
    x_p = jnp.pad(x_nlc, ((0, N_pad - N), (0, 0), (0, C_PAD - C_in)))

    w_stacked, b_stacked = _pack_params(params)

    kernel = functools.partial(_encoder_fused_kernel,
                               num_layers=num_layers, K=K, pad=pad, L=L)

    out = pl.pallas_call(
        kernel,
        out_shape=jax.ShapeDtypeStruct((N_pad, L, C_PAD), jnp.bfloat16),
        grid=(num_blocks,),
        in_specs=[
            pl.BlockSpec((NB, L, C_PAD), lambda n: (n, 0, 0)),
            pl.BlockSpec((num_layers, K, C_PAD, C_PAD), lambda n: (0, 0, 0, 0)),
            pl.BlockSpec((num_layers, 1, C_PAD), lambda n: (0, 0, 0)),
        ],
        out_specs=pl.BlockSpec((NB, L, C_PAD), lambda n: (n, 0, 0)),
        scratch_shapes=[pltpu.VMEM((NB, L + 2 * HALO, C_PAD), jnp.float32)],
        compiler_params=pltpu.CompilerParams(
            dimension_semantics=("parallel",),
            vmem_limit_bytes=VMEM_LIMIT_BYTES),
    )(x_p, w_stacked, b_stacked)

    out = out[:N, :, :latent_dim].astype(x_ncl.dtype)   # drop batch/channel padding
    return jnp.transpose(out, (0, 2, 1))                 # back to NCW


def init_encoder_params(key, input_features, latent_dim, conv_filters, kernel_size):
    """Deterministic init matching PyTorch Conv1d default (uniform +- 1/sqrt(fan_in))."""
    params = []
    cur = input_features
    for filt in list(conv_filters) + [latent_dim]:
        key, kw, kb = jax.random.split(key, 3)
        fan_in = cur * kernel_size
        bound = 1.0 / np.sqrt(fan_in)
        w = jax.random.uniform(kw, (filt, cur, kernel_size), jnp.float32, -bound, bound)
        b = jax.random.uniform(kb, (filt,), jnp.float32, -bound, bound)
        params.append((w, b))
        cur = filt
    return params


def _reference_forward(params, x_ncl, kernel_size):
    """Pure-JAX reference matching the kernel's bf16-operand / f32-accumulate math."""
    pad = (kernel_size - 1) // 2
    x = x_ncl.astype(jnp.float32)
    for (w, b) in params:
        y = lax.conv_general_dilated(
            x.astype(jnp.bfloat16), w.astype(jnp.bfloat16),
            window_strides=(1,), padding=[(pad, pad)],
            dimension_numbers=("NCH", "OIH", "NCH"),
            preferred_element_type=jnp.float32)
        x = jnp.maximum(y + b[None, :, None].astype(jnp.float32), 0.0)
    return x.astype(jnp.bfloat16).astype(jnp.float32)   # match kernel's bf16 output


if __name__ == "__main__":
    # Small shapes consistent with EncoderNet(input_features=4, latent_dim=6,
    # conv_filters=[8, 16], kernel_size=3, activation_fn=nn.ReLU())
    N, C_in, L = 2, 4, 16
    conv_filters = (8, 16)
    latent_dim = 6
    kernel_size = 3

    key = jax.random.PRNGKey(0)
    kx, kp = jax.random.split(key)
    x = jax.random.normal(kx, (N, C_in, L), dtype=jnp.float32)
    params = init_encoder_params(kp, C_in, latent_dim, conv_filters, kernel_size)

    out = jax.block_until_ready(encoder_forward(params, x))
    assert out.shape == (N, latent_dim, L), out.shape

    ref = jax.block_until_ready(_reference_forward(params, x, kernel_size))
    np.testing.assert_allclose(np.asarray(out), np.asarray(ref), rtol=1e-2, atol=1e-2)

    print("KERNEL_OK")
</pallas_src>

<mosaic_0001>
module attributes {stable_mosaic.version = 11 : i64} {
  func.func @_encoder_fused_kernel(%arg0: i32, %arg1: memref<1x16x128xbf16, #tpu.memory_space<vmem>>, %arg2: memref<3x3x128x128xbf16, #tpu.memory_space<vmem>>, %arg3: memref<3x1x128xf32, #tpu.memory_space<vmem>>, %arg4: memref<1x16x128xbf16, #tpu.memory_space<vmem>>, %arg5: memref<1x32x128xf32, #tpu.memory_space<vmem>>) attributes {dimension_semantics = [#tpu.dimension_semantics<parallel>], iteration_bounds = array<i64: 2>, scalar_prefetch = 0 : i64, scratch_operands = 1 : i64, tpu.core_type = #tpu.core_type<tc>, window_params = [{transform_indices = @transform_0, window_bounds = array<i64: 1, 16, 128>}, {pipeline_mode = #tpu.pipeline_mode<synchronous>, transform_indices = @transform_1, window_bounds = array<i64: 3, 3, 128, 128>}, {pipeline_mode = #tpu.pipeline_mode<synchronous>, transform_indices = @transform_2, window_bounds = array<i64: 3, 1, 128>}, {transform_indices = @transform_3, window_bounds = array<i64: 1, 16, 128>}]} {
    %cst = arith.constant 0.000000e+00 : f32
    %0 = vector.broadcast %cst : f32 to vector<1x8x128xf32>
    %c0 = arith.constant 0 : index
    %c0_0 = arith.constant 0 : index
    %c0_1 = arith.constant 0 : index
    %1 = vector.load %arg5[%c0, %c0_0, %c0_1] : memref<1x32x128xf32, #tpu.memory_space<vmem>>, vector<1x8x128xf32>
    tpu.vector_store %arg5[%c0, %c0_0, %c0_1], %0 {strides = array<i32>} : memref<1x32x128xf32, #tpu.memory_space<vmem>>, vector<1x8x128xf32>,
    %cst_2 = arith.constant 0.000000e+00 : f32
    %2 = vector.broadcast %cst_2 : f32 to vector<1x8x128xf32>
    %c0_3 = arith.constant 0 : index
    %c24 = arith.constant 24 : index
    %c0_4 = arith.constant 0 : index
    %3 = vector.load %arg5[%c0_3, %c24, %c0_4] : memref<1x32x128xf32, #tpu.memory_space<vmem>>, vector<1x8x128xf32>
    tpu.vector_store %arg5[%c0_3, %c24, %c0_4], %2 {strides = array<i32>} : memref<1x32x128xf32, #tpu.memory_space<vmem>>, vector<1x8x128xf32>,
    %c0_5 = arith.constant 0 : index
    %c0_6 = arith.constant 0 : index
    %c0_7 = arith.constant 0 : index
    %4 = vector.load %arg1[%c0_5, %c0_6, %c0_7] : memref<1x16x128xbf16, #tpu.memory_space<vmem>>, vector<1x16x128xbf16>
    %5 = arith.extf %4 : vector<1x16x128xbf16> to vector<1x16x128xf32>
    %c0_8 = arith.constant 0 : index
    %c8 = arith.constant 8 : index
    %c0_9 = arith.constant 0 : index
    %6 = vector.load %arg5[%c0_8, %c8, %c0_9] : memref<1x32x128xf32, #tpu.memory_space<vmem>>, vector<1x16x128xf32>
    tpu.vector_store %arg5[%c0_8, %c8, %c0_9], %5 {strides = array<i32>} : memref<1x32x128xf32, #tpu.memory_space<vmem>>, vector<1x16x128xf32>,
    %c0_10 = arith.constant 0 : index
    %c0_11 = arith.constant 0 : index
    %c0_12 = arith.constant 0 : index
    %7 = vector.load %arg5[%c0_10, %c0_11, %c0_12] : memref<1x32x128xf32, #tpu.memory_space<vmem>>, vector<1x32x128xf32>
    %c1_i32 = arith.constant 1 : i32
    %8 = tpu.dynamic_rotate %7 by %c1_i32 dim 1 : vector<1x32x128xf32>, i32 -> vector<1x32x128xf32>
    %9 = vector.extract_strided_slice %8 {offsets = [0, 8, 0], sizes = [1, 16, 128], strides = [1, 1, 1]} : vector<1x32x128xf32> to vector<1x16x128xf32>
    %10 = vector.shape_cast %9 : vector<1x16x128xf32> to vector<16x128xf32>
    %11 = arith.truncf %10 : vector<16x128xf32> to vector<16x128xbf16>
    %c0_13 = arith.constant 0 : index
    %c0_14 = arith.constant 0 : index
    %c0_15 = arith.constant 0 : index
    %c0_16 = arith.constant 0 : index
    %12 = vector.load %arg2[%c0_13, %c0_14, %c0_15, %c0_16] : memref<3x3x128x128xbf16, #tpu.memory_space<vmem>>, vector<1x1x128x128xbf16>
    %13 = vector.shape_cast %12 : vector<1x1x128x128xbf16> to vector<128x128xbf16>
    %cst_17 = arith.constant dense<0.000000e+00> : vector<16x128xf32>
    %14 = tpu.matmul %11, %13, %cst_17 {dimension_numbers = #tpu.dot_dimension_numbers<[1], [0], [0], [1], [0, 0, 1, 1], [], []>} : vector<16x128xbf16>, vector<128x128xbf16>, vector<16x128xf32> -> vector<16x128xf32>
    %15 = vector.extract_strided_slice %7 {offsets = [0, 8, 0], sizes = [1, 16, 128], strides = [1, 1, 1]} : vector<1x32x128xf32> to vector<1x16x128xf32>
    %16 = vector.shape_cast %15 : vector<1x16x128xf32> to vector<16x128xf32>
    %17 = arith.truncf %16 : vector<16x128xf32> to vector<16x128xbf16>
    %c0_18 = arith.constant 0 : index
    %c1 = arith.constant 1 : index
    %c0_19 = arith.constant 0 : index
    %c0_20 = arith.constant 0 : index
    %18 = vector.load %arg2[%c0_18, %c1, %c0_19, %c0_20] : memref<3x3x128x128xbf16, #tpu.memory_space<vmem>>, vector<1x1x128x128xbf16>
    %19 = vector.shape_cast %18 : vector<1x1x128x128xbf16> to vector<128x128xbf16>
    %cst_21 = arith.constant dense<0.000000e+00> : vector<16x128xf32>
    %20 = tpu.matmul %17, %19, %cst_21 {dimension_numbers = #tpu.dot_dimension_numbers<[1], [0], [0], [1], [0, 0, 1, 1], [], []>} : vector<16x128xbf16>, vector<128x128xbf16>, vector<16x128xf32> -> vector<16x128xf32>
    %21 = arith.addf %14, %20 : vector<16x128xf32>
    %c31_i32 = arith.constant 31 : i32
    %22 = tpu.dynamic_rotate %7 by %c31_i32 dim 1 : vector<1x32x128xf32>, i32 -> vector<1x32x128xf32>
    %23 = vector.extract_strided_slice %22 {offsets = [0, 8, 0], sizes = [1, 16, 128], strides = [1, 1, 1]} : vector<1x32x128xf32> to vector<1x16x128xf32>
    %24 = vector.shape_cast %23 : vector<1x16x128xf32> to vector<16x128xf32>
    %25 = arith.truncf %24 : vector<16x128xf32> to vector<16x128xbf16>
    %c0_22 = arith.constant 0 : index
    %c2 = arith.constant 2 : index
    %c0_23 = arith.constant 0 : index
    %c0_24 = arith.constant 0 : index
    %26 = vector.load %arg2[%c0_22, %c2, %c0_23, %c0_24] : memref<3x3x128x128xbf16, #tpu.memory_space<vmem>>, vector<1x1x128x128xbf16>
    %27 = vector.shape_cast %26 : vector<1x1x128x128xbf16> to vector<128x128xbf16>
    %cst_25 = arith.constant dense<0.000000e+00> : vector<16x128xf32>
    %28 = tpu.matmul %25, %27, %cst_25 {dimension_numbers = #tpu.dot_dimension_numbers<[1], [0], [0], [1], [0, 0, 1, 1], [], []>} : vector<16x128xbf16>, vector<128x128xbf16>, vector<16x128xf32> -> vector<16x128xf32>
    %29 = arith.addf %21, %28 : vector<16x128xf32>
    %c0_26 = arith.constant 0 : index
    %c0_27 = arith.constant 0 : index
    %c0_28 = arith.constant 0 : index
    %30 = vector.load %arg3[%c0_26, %c0_27, %c0_28] : memref<3x1x128xf32, #tpu.memory_space<vmem>>, vector<1x1x128xf32>
    %31 = vector.shape_cast %30 : vector<1x1x128xf32> to vector<1x128xf32>
    %32 = vector.broadcast %31 : vector<1x128xf32> to vector<16x128xf32>
    %33 = arith.addf %29, %32 : vector<16x128xf32>
    %cst_29 = arith.constant 0.000000e+00 : f32
    %34 = vector.broadcast %cst_29 : f32 to vector<16x128xf32>
    %35 = arith.maximumf %33, %34 : vector<16x128xf32>
    %36 = vector.shape_cast %35 : vector<16x128xf32> to vector<1x16x128xf32>
    %c0_30 = arith.constant 0 : index
    %c8_31 = arith.constant 8 : index
    %c0_32 = arith.constant 0 : index
    %37 = vector.load %arg5[%c0_30, %c8_31, %c0_32] : memref<1x32x128xf32, #tpu.memory_space<vmem>>, vector<1x16x128xf32>
    tpu.vector_store %arg5[%c0_30, %c8_31, %c0_32], %36 {strides = array<i32>} : memref<1x32x128xf32, #tpu.memory_space<vmem>>, vector<1x16x128xf32>,
    %c0_33 = arith.constant 0 : index
    %c0_34 = arith.constant 0 : index
    %c0_35 = arith.constant 0 : index
    %38 = vector.load %arg5[%c0_33, %c0_34, %c0_35] : memref<1x32x128xf32, #tpu.memory_space<vmem>>, vector<1x32x128xf32>
    %c1_i32_36 = arith.constant 1 : i32
    %39 = tpu.dynamic_rotate %38 by %c1_i32_36 dim 1 : vector<1x32x128xf32>, i32 -> vector<1x32x128xf32>
    %40 = vector.extract_strided_slice %39 {offsets = [0, 8, 0], sizes = [1, 16, 128], strides = [1, 1, 1]} : vector<1x32x128xf32> to vector<1x16x128xf32>
    %41 = vector.shape_cast %40 : vector<1x16x128xf32> to vector<16x128xf32>
    %42 = arith.truncf %41 : vector<16x128xf32> to vector<16x128xbf16>
    %c1_37 = arith.constant 1 : index
    %c0_38 = arith.constant 0 : index
    %c0_39 = arith.constant 0 : index
    %c0_40 = arith.constant 0 : index
    %43 = vector.load %arg2[%c1_37, %c0_38, %c0_39, %c0_40] : memref<3x3x128x128xbf16, #tpu.memory_space<vmem>>, vector<1x1x128x128xbf16>
    %44 = vector.shape_cast %43 : vector<1x1x128x128xbf16> to vector<128x128xbf16>
    %cst_41 = arith.constant dense<0.000000e+00> : vector<16x128xf32>
    %45 = tpu.matmul %42, %44, %cst_41 {dimension_numbers = #tpu.dot_dimension_numbers<[1], [0], [0], [1], [0, 0, 1, 1], [], []>} : vector<16x128xbf16>, vector<128x128xbf16>, vector<16x128xf32> -> vector<16x128xf32>
    %46 = vector.extract_strided_slice %38 {offsets = [0, 8, 0], sizes = [1, 16, 128], strides = [1, 1, 1]} : vector<1x32x128xf32> to vector<1x16x128xf32>
    %47 = vector.shape_cast %46 : vector<1x16x128xf32> to vector<16x128xf32>
    %48 = arith.truncf %47 : vector<16x128xf32> to vector<16x128xbf16>
    %c1_42 = arith.constant 1 : index
    %c1_43 = arith.constant 1 : index
    %c0_44 = arith.constant 0 : index
    %c0_45 = arith.constant 0 : index
    %49 = vector.load %arg2[%c1_42, %c1_43, %c0_44, %c0_45] : memref<3x3x128x128xbf16, #tpu.memory_space<vmem>>, vector<1x1x128x128xbf16>
    %50 = vector.shape_cast %49 : vector<1x1x128x128xbf16> to vector<128x128xbf16>
    %cst_46 = arith.constant dense<0.000000e+00> : vector<16x128xf32>
    %51 = tpu.matmul %48, %50, %cst_46 {dimension_numbers = #tpu.dot_dimension_numbers<[1], [0], [0], [1], [0, 0, 1, 1], [], []>} : vector<16x128xbf16>, vector<128x128xbf16>, vector<16x128xf32> -> vector<16x128xf32>
    %52 = arith.addf %45, %51 : vector<16x128xf32>
    %c31_i32_47 = arith.constant 31 : i32
    %53 = tpu.dynamic_rotate %38 by %c31_i32_47 dim 1 : vector<1x32x128xf32>, i32 -> vector<1x32x128xf32>
    %54 = vector.extract_strided_slice %53 {offsets = [0, 8, 0], sizes = [1, 16, 128], strides = [1, 1, 1]} : vector<1x32x128xf32> to vector<1x16x128xf32>
    %55 = vector.shape_cast %54 : vector<1x16x128xf32> to vector<16x128xf32>
    %56 = arith.truncf %55 : vector<16x128xf32> to vector<16x128xbf16>
    %c1_48 = arith.constant 1 : index
    %c2_49 = arith.constant 2 : index
    %c0_50 = arith.constant 0 : index
    %c0_51 = arith.constant 0 : index
    %57 = vector.load %arg2[%c1_48, %c2_49, %c0_50, %c0_51] : memref<3x3x128x128xbf16, #tpu.memory_space<vmem>>, vector<1x1x128x128xbf16>
    %58 = vector.shape_cast %57 : vector<1x1x128x128xbf16> to vector<128x128xbf16>
    %cst_52 = arith.constant dense<0.000000e+00> : vector<16x128xf32>
    %59 = tpu.matmul %56, %58, %cst_52 {dimension_numbers = #tpu.dot_dimension_numbers<[1], [0], [0], [1], [0, 0, 1, 1], [], []>} : vector<16x128xbf16>, vector<128x128xbf16>, vector<16x128xf32> -> vector<16x128xf32>
    %60 = arith.addf %52, %59 : vector<16x128xf32>
    %c1_53 = arith.constant 1 : index
    %c0_54 = arith.constant 0 : index
    %c0_55 = arith.constant 0 : index
    %61 = vector.load %arg3[%c1_53, %c0_54, %c0_55] : memref<3x1x128xf32, #tpu.memory_space<vmem>>, vector<1x1x128xf32>
    %62 = vector.shape_cast %61 : vector<1x1x128xf32> to vector<1x128xf32>
    %63 = vector.broadcast %62 : vector<1x128xf32> to vector<16x128xf32>
    %64 = arith.addf %60, %63 : vector<16x128xf32>
    %cst_56 = arith.constant 0.000000e+00 : f32
    %65 = vector.broadcast %cst_56 : f32 to vector<16x128xf32>
    %66 = arith.maximumf %64, %65 : vector<16x128xf32>
    %67 = vector.shape_cast %66 : vector<16x128xf32> to vector<1x16x128xf32>
    %c0_57 = arith.constant 0 : index
    %c8_58 = arith.constant 8 : index
    %c0_59 = arith.constant 0 : index
    %68 = vector.load %arg5[%c0_57, %c8_58, %c0_59] : memref<1x32x128xf32, #tpu.memory_space<vmem>>, vector<1x16x128xf32>
    tpu.vector_store %arg5[%c0_57, %c8_58, %c0_59], %67 {strides = array<i32>} : memref<1x32x128xf32, #tpu.memory_space<vmem>>, vector<1x16x128xf32>,
    %c0_60 = arith.constant 0 : index
    %c0_61 = arith.constant 0 : index
    %c0_62 = arith.constant 0 : index
    %69 = vector.load %arg5[%c0_60, %c0_61, %c0_62] : memref<1x32x128xf32, #tpu.memory_space<vmem>>, vector<1x32x128xf32>
    %c1_i32_63 = arith.constant 1 : i32
    %70 = tpu.dynamic_rotate %69 by %c1_i32_63 dim 1 : vector<1x32x128xf32>, i32 -> vector<1x32x128xf32>
    %71 = vector.extract_strided_slice %70 {offsets = [0, 8, 0], sizes = [1, 16, 128], strides = [1, 1, 1]} : vector<1x32x128xf32> to vector<1x16x128xf32>
    %72 = vector.shape_cast %71 : vector<1x16x128xf32> to vector<16x128xf32>
    %73 = arith.truncf %72 : vector<16x128xf32> to vector<16x128xbf16>
    %c2_64 = arith.constant 2 : index
    %c0_65 = arith.constant 0 : index
    %c0_66 = arith.constant 0 : index
    %c0_67 = arith.constant 0 : index
    %74 = vector.load %arg2[%c2_64, %c0_65, %c0_66, %c0_67] : memref<3x3x128x128xbf16, #tpu.memory_space<vmem>>, vector<1x1x128x128xbf16>
    %75 = vector.shape_cast %74 : vector<1x1x128x128xbf16> to vector<128x128xbf16>
    %cst_68 = arith.constant dense<0.000000e+00> : vector<16x128xf32>
    %76 = tpu.matmul %73, %75, %cst_68 {dimension_numbers = #tpu.dot_dimension_numbers<[1], [0], [0], [1], [0, 0, 1, 1], [], []>} : vector<16x128xbf16>, vector<128x128xbf16>, vector<16x128xf32> -> vector<16x128xf32>
    %77 = vector.extract_strided_slice %69 {offsets = [0, 8, 0], sizes = [1, 16, 128], strides = [1, 1, 1]} : vector<1x32x128xf32> to vector<1x16x128xf32>
    %78 = vector.shape_cast %77 : vector<1x16x128xf32> to vector<16x128xf32>
    %79 = arith.truncf %78 : vector<16x128xf32> to vector<16x128xbf16>
    %c2_69 = arith.constant 2 : index
    %c1_70 = arith.constant 1 : index
    %c0_71 = arith.constant 0 : index
    %c0_72 = arith.constant 0 : index
    %80 = vector.load %arg2[%c2_69, %c1_70, %c0_71, %c0_72] : memref<3x3x128x128xbf16, #tpu.memory_space<vmem>>, vector<1x1x128x128xbf16>
    %81 = vector.shape_cast %80 : vector<1x1x128x128xbf16> to vector<128x128xbf16>
    %cst_73 = arith.constant dense<0.000000e+00> : vector<16x128xf32>
    %82 = tpu.matmul %79, %81, %cst_73 {dimension_numbers = #tpu.dot_dimension_numbers<[1], [0], [0], [1], [0, 0, 1, 1], [], []>} : vector<16x128xbf16>, vector<128x128xbf16>, vector<16x128xf32> -> vector<16x128xf32>
    %83 = arith.addf %76, %82 : vector<16x128xf32>
    %c31_i32_74 = arith.constant 31 : i32
    %84 = tpu.dynamic_rotate %69 by %c31_i32_74 dim 1 : vector<1x32x128xf32>, i32 -> vector<1x32x128xf32>
    %85 = vector.extract_strided_slice %84 {offsets = [0, 8, 0], sizes = [1, 16, 128], strides = [1, 1, 1]} : vector<1x32x128xf32> to vector<1x16x128xf32>
    %86 = vector.shape_cast %85 : vector<1x16x128xf32> to vector<16x128xf32>
    %87 = arith.truncf %86 : vector<16x128xf32> to vector<16x128xbf16>
    %c2_75 = arith.constant 2 : index
    %c2_76 = arith.constant 2 : index
    %c0_77 = arith.constant 0 : index
    %c0_78 = arith.constant 0 : index
    %88 = vector.load %arg2[%c2_75, %c2_76, %c0_77, %c0_78] : memref<3x3x128x128xbf16, #tpu.memory_space<vmem>>, vector<1x1x128x128xbf16>
    %89 = vector.shape_cast %88 : vector<1x1x128x128xbf16> to vector<128x128xbf16>
    %cst_79 = arith.constant dense<0.000000e+00> : vector<16x128xf32>
    %90 = tpu.matmul %87, %89, %cst_79 {dimension_numbers = #tpu.dot_dimension_numbers<[1], [0], [0], [1], [0, 0, 1, 1], [], []>} : vector<16x128xbf16>, vector<128x128xbf16>, vector<16x128xf32> -> vector<16x128xf32>
    %91 = arith.addf %83, %90 : vector<16x128xf32>
    %c2_80 = arith.constant 2 : index
    %c0_81 = arith.constant 0 : index
    %c0_82 = arith.constant 0 : index
    %92 = vector.load %arg3[%c2_80, %c0_81, %c0_82] : memref<3x1x128xf32, #tpu.memory_space<vmem>>, vector<1x1x128xf32>
    %93 = vector.shape_cast %92 : vector<1x1x128xf32> to vector<1x128xf32>
    %94 = vector.broadcast %93 : vector<1x128xf32> to vector<16x128xf32>
    %95 = arith.addf %91, %94 : vector<16x128xf32>
    %cst_83 = arith.constant 0.000000e+00 : f32
    %96 = vector.broadcast %cst_83 : f32 to vector<16x128xf32>
    %97 = arith.maximumf %95, %96 : vector<16x128xf32>
    %98 = vector.shape_cast %97 : vector<16x128xf32> to vector<1x16x128xf32>
    %99 = arith.truncf %98 : vector<1x16x128xf32> to vector<1x16x128xbf16>
    %c0_84 = arith.constant 0 : index
    %c0_85 = arith.constant 0 : index
    %c0_86 = arith.constant 0 : index
    %100 = vector.load %arg4[%c0_84, %c0_85, %c0_86] : memref<1x16x128xbf16, #tpu.memory_space<vmem>>, vector<1x16x128xbf16>
    tpu.vector_store %arg4[%c0_84, %c0_85, %c0_86], %99 {strides = array<i32>} : memref<1x16x128xbf16, #tpu.memory_space<vmem>>, vector<1x16x128xbf16>,
    return
  }
  func.func @transform_0(%arg0: i32) -> (i32, i32, i32) {
    %c0_i32 = arith.constant 0 : i32
    %c0_i32_0 = arith.constant 0 : i32
    %c0_i32_1 = arith.constant 0 : i32
    return %arg0, %c0_i32, %c0_i32_0 : i32, i32, i32
  }
  func.func @transform_1(%arg0: i32) -> (i32, i32, i32, i32) {
    %c0_i32 = arith.constant 0 : i32
    %c0_i32_0 = arith.constant 0 : i32
    %c0_i32_1 = arith.constant 0 : i32
    %c0_i32_2 = arith.constant 0 : i32
    %c0_i32_3 = arith.constant 0 : i32
    return %c0_i32, %c0_i32_0, %c0_i32_1, %c0_i32_2 : i32, i32, i32, i32
  }
  func.func @transform_2(%arg0: i32) -> (i32, i32, i32) {
    %c0_i32 = arith.constant 0 : i32
    %c0_i32_0 = arith.constant 0 : i32
    %c0_i32_1 = arith.constant 0 : i32
    %c0_i32_2 = arith.constant 0 : i32
    return %c0_i32, %c0_i32_0, %c0_i32_1 : i32, i32, i32
  }
  func.func @transform_3(%arg0: i32) -> (i32, i32, i32) {
    %c0_i32 = arith.constant 0 : i32
    %c0_i32_0 = arith.constant 0 : i32
    %c0_i32_1 = arith.constant 0 : i32
    return %arg0, %c0_i32, %c0_i32_0 : i32, i32, i32
  }
}

</mosaic_0001>

<llo_original>
// kernel: tpu_custom_call.1
$region0: #{tpu_custom_call.1}
  #allocation0 [shape = 'u32[]', space=smem, size = 0x4, offset = 0x4, fixed_abs, tag = 'smem constant byte address 0x4 - core index']
  #allocation1 [shape = 'u32[144,128]{1,0:T(1,128)}', space=vmem, size = 0x12000, scoped, tag = 'internal scratch']
  #allocation2 [shape = 'f32[1,32,128]{2,1,0:T(8,128)}', space=vmem, size = 0x4000, scoped, tag = 'scratch operand']
  %s0 = inlined_call_operand.hbm [shape: bf16[2,16,128], index: 0, kind: input, shape index: {}]
  %s1 = inlined_call_operand.hbm [shape: bf16[3,3,128,128], index: 1, kind: input, shape index: {}]
  %s2 = inlined_call_operand.vmem [shape: f32[3,1,128], index: 2, kind: input, shape index: {}]
  %s3 = inlined_call_operand.hbm [shape: bf16[2,16,128], index: 3, kind: output, shape index: {}]
  %s4 = sld [smem:[#allocation0]]
  $region53: #{tpu_custom_call.1} parent=0
    _
  %s6 = ssub.s32 1, %s4
  %s7 = scalar_select 0, %s6, %s4
  $region1: #{tpu_custom_call.1} parent=0
    #allocation3 [shape = 'u8[8192]{0}', space=vmem, size = 0x2000, scoped, tag = 'input window, operand 0']
    #allocation4 [shape = 's32[2]{0}', space=sflag, size = 0x8, scoped, tag = 'scoped memory for tpu_custom_call.1']
    #allocation5 [shape = 's32[2]{0}', space=sflag, size = 0x8, scoped, tag = 'scoped memory for tpu_custom_call.1']
    #allocation6 [shape = 'u8[294912]{0}', space=vmem, size = 0x48000, scoped, tag = 'input window, operand 1, single buffered']
    #allocation7 [shape = 's32[1]{0}', space=sflag, size = 0x4, scoped, tag = 'scoped memory for tpu_custom_call.1']
    #allocation8 [shape = 'u8[8192]{0}', space=vmem, size = 0x2000, scoped, tag = 'output window, operand 0']
    %8 = vsyncpa [#allocation4], 0
    %s9 = scalar_lea.sflag [#allocation4], 1
    %10 = vsyncpa %s9, 0
    %11 = vsyncpa [#allocation7], 0
    %12 = vsyncpa [#allocation5], 0
    %s13 = scalar_lea.sflag [#allocation5], 1
    %14 = vsyncpa %s13, 0
    loop: start=0, step=1, limit=4
    $region2: #{tpu_custom_call.1} parent=1 // loop_pre_header
      _
    $region3: #{tpu_custom_call.1} parent=1 // loop_header
      %s16 = sphi 0, %s20
      %p17 = scmp.ge.s32.totalorder %s16, 4
      %s26 = sphi 0, %s28
      %s29 = sphi 0, %s26
      %s30 = sphi 0, %s29
      %s46 = sphi 0, %s30
      %s50 = sphi 0, %s50
      %s52 = sphi 0, %s50
      %s53 = sphi 0, %s52
      %s67 = sphi 0, %s53
      %s71 = sphi 0, %s71
      %s73 = sphi 0, %s71
      %s74 = sphi 0, %s73
      %s88 = sphi 0, %s74
      %s94 = sphi 0, %s96
      %s97 = sphi 0, %s94
      %s98 = sphi 0, %s97
      %s114 = sphi 0, %s98
    $region4: #{tpu_custom_call.1} parent=1 // loop_header_branch
      %19 = sbr.rel (%p17) target = $region8
    $region5: #{tpu_custom_call.1} parent=1 // loop_body
      %s21 = ssub.s32 %s16, 1
      %s22 = ssub.s32 %s16, 2
      %s23 = sadd.s32 %s16, 1
      %s24 = ssub.s32 %s16, %s23
      %p25 = scmp.eq.s32.totalorder %s24, 0
      %s27 = sadd.s32 %s26, 1
      %s28 = scalar_select %p25, %s26, %s27
      %p31 = pneg %p25
      %p32 = scmp.eq.s32.totalorder %s16, 1
      %p33 = por %p31, %p32
      %p34 = scmp.ne.s32.totalorder %s26, %s29
      %p35 = scmp.eq.s32.totalorder %s16, 0
      %p36 = por %p34, %p35
      %p37 = scmp.ne.s32.totalorder %s26, %s29
      %p38 = scmp.eq.s32.totalorder %s21, 1
      %p39 = por %p37, %p38
      %p40 = scmp.ne.s32.totalorder %s29, %s30
      %p41 = scmp.eq.s32.totalorder %s21, 0
      %p42 = por %p40, %p41
      %p43 = scmp.ne.s32.totalorder %s29, %s30
      %p44 = scmp.eq.s32.totalorder %s22, 1
      %p45 = por %p43, %p44
      %p47 = scmp.ne.s32.totalorder %s30, %s46
      %p48 = scmp.eq.s32.totalorder %s22, 0
      %p49 = por %p47, %p48
      %s51 = sadd.s32 %s50, 1
      %p54 = scmp.eq.s32.totalorder %s16, 1
      %p55 = scmp.ne.s32.totalorder %s50, %s52
      %p56 = scmp.eq.s32.totalorder %s16, 0
      %p57 = por %p55, %p56
      %p58 = scmp.ne.s32.totalorder %s50, %s52
      %p59 = scmp.eq.s32.totalorder %s21, 1
      %p60 = por %p58, %p59
      %p61 = scmp.ne.s32.totalorder %s52, %s53
      %p62 = scmp.eq.s32.totalorder %s21, 0
      %p63 = por %p61, %p62
      %p64 = scmp.ne.s32.totalorder %s52, %s53
      %p65 = scmp.eq.s32.totalorder %s22, 1
      %p66 = por %p64, %p65
      %p68 = scmp.ne.s32.totalorder %s53, %s67
      %p69 = scmp.eq.s32.totalorder %s22, 0
      %p70 = por %p68, %p69
      %s72 = sadd.s32 %s71, 1
      %p75 = scmp.eq.s32.totalorder %s16, 1
      %p76 = scmp.ne.s32.totalorder %s71, %s73
      %p77 = scmp.eq.s32.totalorder %s16, 0
      %p78 = por %p76, %p77
      %p79 = scmp.ne.s32.totalorder %s71, %s73
      %p80 = scmp.eq.s32.totalorder %s21, 1
      %p81 = por %p79, %p80
      %p82 = scmp.ne.s32.totalorder %s73, %s74
      %p83 = scmp.eq.s32.totalorder %s21, 0
      %p84 = por %p82, %p83
      %p85 = scmp.ne.s32.totalorder %s73, %s74
      %p86 = scmp.eq.s32.totalorder %s22, 1
      %p87 = por %p85, %p86
      %p89 = scmp.ne.s32.totalorder %s74, %s88
      %p90 = scmp.eq.s32.totalorder %s22, 0
      %p91 = por %p89, %p90
      %s92 = ssub.s32 %s16, %s23
      %p93 = scmp.eq.s32.totalorder %s92, 0
      %s95 = sadd.s32 %s94, 1
      %s96 = scalar_select %p93, %s94, %s95
      %p99 = pneg %p93
      %p100 = scmp.eq.s32.totalorder %s16, 1
      %p101 = por %p99, %p100
      %p102 = scmp.ne.s32.totalorder %s94, %s97
      %p103 = scmp.eq.s32.totalorder %s16, 0
      %p104 = por %p102, %p103
      %p105 = scmp.ne.s32.totalorder %s94, %s97
      %p106 = scmp.eq.s32.totalorder %s21, 1
      %p107 = por %p105, %p106
      %p108 = scmp.ne.s32.totalorder %s97, %s98
      %p109 = scmp.eq.s32.totalorder %s21, 0
      %p110 = por %p108, %p109
      %p111 = scmp.ne.s32.totalorder %s97, %s98
      %p112 = scmp.eq.s32.totalorder %s22, 1
      %p113 = por %p111, %p112
      %p115 = scmp.ne.s32.totalorder %s98, %s114
      %p116 = scmp.eq.s32.totalorder %s22, 0
      %p117 = por %p115, %p116
      %p118 = scmp.le.s32.totalorder 1, %s16
      %p119 = scmp.lt.s32.totalorder %s16, 3
      %p120 = pnand %p118, %p119
      %p121 = pneg %p120
      // Predicated region
      $region9: #{tpu_custom_call.1} parent=5 // pred_check
        _
      $region10: #{tpu_custom_call.1} parent=5 // pred_check_branch
        %123 = sbr.rel (%p120) target = $region12
      $region11: #{tpu_custom_call.1} parent=5 // pred_region
        %s124 = ssub.s32 %s16, 1
        // Predicated region
        $region13: #{tpu_custom_call.1} parent=11 // pred_check
          %p125 = pneg %p63
        $region14: #{tpu_custom_call.1} parent=11 // pred_check_branch
          %127 = sbr.rel (%p125) target = $region16
        $region15: #{tpu_custom_call.1} parent=11 // pred_region
          %s129 = ssub.s32 9216, 9216
          %130 = vsyncadd [#allocation7], %s129
          %s131 = sshll.u32 [#allocation6], 4
          %s132 = int_to_ptr.vmem [resolvable:$true] %s131
          %137 = dma.hbm_to_vmem [thread:$0]  %s1, 9216, %s132, [#allocation7], 64, 64, 4
        $region16: #{tpu_custom_call.1} parent=11 // pred_fallthru
          _
        // Predicated region
        $region17: #{tpu_custom_call.1} parent=11 // pred_check
          %p138 = pneg %p84
        $region18: #{tpu_custom_call.1} parent=11 // pred_check_branch
          %140 = sbr.rel (%p138) target = $region20
        $region19: #{tpu_custom_call.1} parent=11 // pred_region
          _
        $region20: #{tpu_custom_call.1} parent=11 // pred_fallthru
          _
      $region12: #{tpu_custom_call.1} parent=5 // pred_fallthru
        _
      %p141 = scmp.lt.s32.totalorder %s16, 2
      // Predicated region
      $region21: #{tpu_custom_call.1} parent=5 // pred_check
        %p142 = pneg %p141
      $region22: #{tpu_custom_call.1} parent=5 // pred_check_branch
        %144 = sbr.rel (%p142) target = $region24
      $region23: #{tpu_custom_call.1} parent=5 // pred_region
        // Predicated region
        $region25: #{tpu_custom_call.1} parent=23 // pred_check
          %p145 = pneg %p36
        $region26: #{tpu_custom_call.1} parent=23 // pred_check_branch
          %147 = sbr.rel (%p145) target = $region28
        $region27: #{tpu_custom_call.1} parent=23 // pred_region
          %s148 = sand.u32 %s26, 1
          %s149 = scalar_lea.sflag [#allocation4], %s148
          %s150 = sand.u32 %s26, 1
          %s151 = smul.addr %s150, 8
          %s152 = scalar_lea.vmem [#allocation3], %s151
          %s154 = ssub.s32 128, 128
          %155 = vsyncadd %s149, %s154
          %s156 = smul.addr %s16, 2
          %s157 = smul.addr %s156, 64
          %s158 = scalar_lea.hbm %s0, %s157
          %s159 = sshll.u32 %s152, 4
          %s160 = int_to_ptr.vmem [resolvable:$true] %s159
          %165 = dma.hbm_to_vmem [thread:$0]  %s158, 128, %s160, %s149, 64, 64, 4
        $region28: #{tpu_custom_call.1} parent=23 // pred_fallthru
          _
      $region24: #{tpu_custom_call.1} parent=5 // pred_fallthru
        _
      %p166 = scmp.le.s32.totalorder 1, %s16
      %p167 = scmp.lt.s32.totalorder %s16, 3
      %p168 = pnand %p166, %p167
      %p169 = pneg %p168
      // Predicated region
      $region29: #{tpu_custom_call.1} parent=5 // pred_check
        _
      $region30: #{tpu_custom_call.1} parent=5 // pred_check_branch
        %171 = sbr.rel (%p168) target = $region32
      $region31: #{tpu_custom_call.1} parent=5 // pred_region
        %s172 = ssub.s32 %s16, 1
        %s173 = sand.u32 %s29, 1
        %s174 = scalar_lea.sflag [#allocation4], %s173
        %s175 = sand.u32 %s29, 1
        %s176 = smul.addr %s175, 8
        %s177 = scalar_lea.vmem [#allocation3], %s176
        // Predicated region
        $region33: #{tpu_custom_call.1} parent=31 // pred_check
          %p178 = pneg %p42
        $region34: #{tpu_custom_call.1} parent=31 // pred_check_branch
          %180 = sbr.rel (%p178) target = $region36
        $region35: #{tpu_custom_call.1} parent=31 // pred_region
          %181 = dma.done %s174, 128
        $region36: #{tpu_custom_call.1} parent=31 // pred_fallthru
          _
        // Predicated region
        $region37: #{tpu_custom_call.1} parent=31 // pred_check
          %p182 = pneg %p63
        $region38: #{tpu_custom_call.1} parent=31 // pred_check_branch
          %184 = sbr.rel (%p182) target = $region40
        $region39: #{tpu_custom_call.1} parent=31 // pred_region
          %185 = dma.done [#allocation7], 9216
        $region40: #{tpu_custom_call.1} parent=31 // pred_fallthru
          _
        %s186 = sand.u32 %s29, 1
        %s187 = scalar_lea.sflag [#allocation4], %s186
        %s188 = sand.u32 %s29, 1
        %s189 = smul.addr %s188, 8
        %s190 = scalar_lea.vmem [#allocation3], %s189
        %p191 = pneg %p42
        %p192 = pneg %p39
        %p193 = pneg %p63
        %p194 = pneg %p60
        %p195 = pneg %p84
        %p196 = pneg %p81
        %p197 = pneg %p110
        %p198 = pneg %p107
        %s199 = sand.u32 %s97, 1
        %s200 = scalar_lea.sflag [#allocation5], %s199
        %s201 = sand.u32 %s97, 1
        %s202 = smul.addr %s201, 8
        %s203 = scalar_lea.vmem [#allocation8], %s202
        %205 = vst [vmem:[#allocation2] sm:$0xff] 0.0
        %206 = vst [vmem:[#allocation2 + $0x18] sm:$0xff] 0.0
        %v207 = vld [vmem:[%s177] sm:$0xf]
        %v208 = vld [vmem:[%s177 + $0x4] sm:$0xf]
        %v209 = vunpack.c.l.bf16 %v207
        %v210 = vunpack.c.l.bf16 %v208
        %211 = vst [vmem:[#allocation2 + $0x8] sm:$0xff] %v209
        %212 = vst [vmem:[#allocation2 + $0x10] sm:$0xff] %v210
        %v213 = vld [vmem:[#allocation2] sm:$0xff]
        %v214 = vld [vmem:[#allocation2 + $0x8] sm:$0xff]
        %v215 = vld [vmem:[#allocation2 + $0x10] sm:$0xff]
        %v216 = vld [vmem:[#allocation2 + $0x18] sm:$0xff]
        %v217 = vrot.slane %v213, 7
        %v218 = vrot.slane %v214, 7
        %v219 = vrot.slane %v215, 7
        %v220 = vlaneseq
        %v221 = vshrl.u32 %v220, 7
        %vm222 = vcmp.lt.s32.totalorder %v221, 1
        %v223 = vsel %vm222, %v218, %v219
        %v224 = vsel %vm222, %v217, %v218
        %v225 = vpack.c.bf16 %v223, %v224
        %v226 = vld [vmem:[#allocation6] sm:$0xf]
        %v227 = vld [vmem:[#allocation6 + $0x4] sm:$0xf]
        %v228 = vld [vmem:[#allocation6 + $0x8] sm:$0xf]
        %v229 = vld [vmem:[#allocation6 + $0xc] sm:$0xf]
        %v230 = vld [vmem:[#allocation6 + $0x10] sm:$0xf]
        %v231 = vld [vmem:[#allocation6 + $0x14] sm:$0xf]
        %v232 = vld [vmem:[#allocation6 + $0x18] sm:$0xf]
        %v233 = vld [vmem:[#allocation6 + $0x1c] sm:$0xf]
        %v234 = vld [vmem:[#allocation6 + $0x20] sm:$0xf]
        %v235 = vld [vmem:[#allocation6 + $0x24] sm:$0xf]
        %v236 = vld [vmem:[#allocation6 + $0x28] sm:$0xf]
        %v237 = vld [vmem:[#allocation6 + $0x2c] sm:$0xf]
        %v238 = vld [vmem:[#allocation6 + $0x30] sm:$0xf]
        %v239 = vld [vmem:[#allocation6 + $0x34] sm:$0xf]
        %v240 = vld [vmem:[#allocation6 + $0x38] sm:$0xf]
        %v241 = vld [vmem:[#allocation6 + $0x3c] sm:$0xf]
        %v242 = vpack.c.bf16 %v215, %v214
        %s243 = scalar_lea.vmem [#allocation6], 64
        %v244 = vld [vmem:[%s243] sm:$0xf]
        %v245 = vld [vmem:[%s243 + $0x4] sm:$0xf]
        %v246 = vld [vmem:[%s243 + $0x8] sm:$0xf]
        %v247 = vld [vmem:[%s243 + $0xc] sm:$0xf]
        %v248 = vld [vmem:[%s243 + $0x10] sm:$0xf]
        %v249 = vld [vmem:[%s243 + $0x14] sm:$0xf]
        %v250 = vld [vmem:[%s243 + $0x18] sm:$0xf]
        %v251 = vld [vmem:[%s243 + $0x1c] sm:$0xf]
        %v252 = vld [vmem:[%s243 + $0x20] sm:$0xf]
        %v253 = vld [vmem:[%s243 + $0x24] sm:$0xf]
        %v254 = vld [vmem:[%s243 + $0x28] sm:$0xf]
        %v255 = vld [vmem:[%s243 + $0x2c] sm:$0xf]
        %v256 = vld [vmem:[%s243 + $0x30] sm:$0xf]
        %v257 = vld [vmem:[%s243 + $0x34] sm:$0xf]
        %v258 = vld [vmem:[%s243 + $0x38] sm:$0xf]
        %v259 = vld [vmem:[%s243 + $0x3c] sm:$0xf]
        %v276 = vunpack.c.l.b16 %v244
        %v277 = vunpack.c.l.b16 %v245
        %v278 = vunpack.c.l.b16 %v246
        %v279 = vunpack.c.l.b16 %v247
        %v280 = vunpack.c.l.b16 %v248
        %v281 = vunpack.c.l.b16 %v249
        %v282 = vunpack.c.l.b16 %v250
        %v283 = vunpack.c.l.b16 %v251
        %v284 = vunpack.c.l.b16 %v252
        %v285 = vunpack.c.l.b16 %v253
        %v286 = vunpack.c.l.b16 %v254
        %v287 = vunpack.c.l.b16 %v255
        %v288 = vunpack.c.l.b16 %v256
        %v289 = vunpack.c.l.b16 %v257
        %v290 = vunpack.c.l.b16 %v258
        %v291 = vunpack.c.l.b16 %v259
        %v292 = vpack.c.b16 %v277, %v276
        %v293 = vpack.c.b16 %v279, %v278
        %v294 = vpack.c.b16 %v281, %v280
        %v295 = vpack.c.b16 %v283, %v282
        %v296 = vpack.c.b16 %v285, %v284
        %v297 = vpack.c.b16 %v287, %v286
        %v298 = vpack.c.b16 %v289, %v288
        %v299 = vpack.c.b16 %v291, %v290
        %308 = vmatprep.subr.bf16.mxu0 0
        %309 = vmatpush1.bf16.msra.mxu0 %v292
        %310 = vmatprep.subr.bf16.mxu0 0
        %311 = vmatpush1.bf16.msra.mxu0 %v293
        %312 = vmatprep.subr.bf16.mxu0 0
        %313 = vmatpush1.bf16.msra.mxu0 %v294
        %314 = vmatprep.subr.bf16.mxu0 0
        %315 = vmatpush1.bf16.msra.mxu0 %v295
        %316 = vmatprep.subr.bf16.mxu0 0
        %317 = vmatpush1.bf16.msra.mxu0 %v296
        %318 = vmatprep.subr.bf16.mxu0 0
        %319 = vmatpush1.bf16.msra.mxu0 %v297
        %320 = vmatprep.subr.bf16.mxu0 0
        %321 = vmatpush1.bf16.msra.mxu0 %v298
        %322 = vmatprep.subr.bf16.mxu0 0
        %323 = vmatpush1.bf16.msra.mxu0 %v299
        %324 = vmatprep.subr.bf16.mxu0 0
        %325 = vmatpush1.bf16.msra.mxu0 0
        %326 = vmatprep.subr.bf16.mxu0 0
        %327 = vmatpush1.bf16.msra.mxu0 0
        %328 = vmatprep.subr.bf16.mxu0 0
        %329 = vmatpush1.bf16.msra.mxu0 0
        %330 = vmatprep.subr.bf16.mxu0 0
        %331 = vmatpush1.bf16.msra.mxu0 0
        %332 = vmatprep.subr.bf16.mxu0 0
        %333 = vmatpush1.bf16.msra.mxu0 0
        %334 = vmatprep.subr.bf16.mxu0 0
        %335 = vmatpush1.bf16.msra.mxu0 0
        %336 = vmatprep.subr.bf16.mxu0 0
        %337 = vmatpush1.bf16.msra.mxu0 0
        %338 = vmatprep.subr.bf16.mxu0 0
        %339 = vmatpush1.bf16.msra.mxu0 0
        %340 = vmatprep.mubr.bf16.mxu0 0
        %341 = vmatmul.mubr.bf16.gmra.mrb[0].mxu0 %v242
        %v342 = vpop.f32.mrb[0].mxu0
        %v343 = vadd.f32 0.0, %v342
        %v344 = vpop.f32.mrb[0].mxu0
        %v345 = vpop.f32.mrb[0].mxu0
        %v346 = vadd.f32 0.0, %v345
        %v347 = vpop.f32.mrb[0].mxu0
        %348 = vdwg.mxu0
        %v365 = vunpack.c.l.b16 %v226
        %v366 = vunpack.c.l.b16 %v227
        %v367 = vunpack.c.l.b16 %v228
        %v368 = vunpack.c.l.b16 %v229
        %v369 = vunpack.c.l.b16 %v230
        %v370 = vunpack.c.l.b16 %v231
        %v371 = vunpack.c.l.b16 %v232
        %v372 = vunpack.c.l.b16 %v233
        %v373 = vunpack.c.l.b16 %v234
        %v374 = vunpack.c.l.b16 %v235
        %v375 = vunpack.c.l.b16 %v236
        %v376 = vunpack.c.l.b16 %v237
        %v377 = vunpack.c.l.b16 %v238
        %v378 = vunpack.c.l.b16 %v239
        %v379 = vunpack.c.l.b16 %v240
        %v380 = vunpack.c.l.b16 %v241
        %v381 = vpack.c.b16 %v366, %v365
        %v382 = vpack.c.b16 %v368, %v367
        %v383 = vpack.c.b16 %v370, %v369
        %v384 = vpack.c.b16 %v372, %v371
        %v385 = vpack.c.b16 %v374, %v373
        %v386 = vpack.c.b16 %v376, %v375
        %v387 = vpack.c.b16 %v378, %v377
        %v388 = vpack.c.b16 %v380, %v379
        %397 = vmatprep.subr.bf16.mxu0 0
        %398 = vmatpush1.bf16.msra.mxu0 %v381
        %399 = vmatprep.subr.bf16.mxu0 0
        %400 = vmatpush1.bf16.msra.mxu0 %v382
        %401 = vmatprep.subr.bf16.mxu0 0
        %402 = vmatpush1.bf16.msra.mxu0 %v383
        %403 = vmatprep.subr.bf16.mxu0 0
        %404 = vmatpush1.bf16.msra.mxu0 %v384
        %405 = vmatprep.subr.bf16.mxu0 0
        %406 = vmatpush1.bf16.msra.mxu0 %v385
        %407 = vmatprep.subr.bf16.mxu0 0
        %408 = vmatpush1.bf16.msra.mxu0 %v386
        %409 = vmatprep.subr.bf16.mxu0 0
        %410 = vmatpush1.bf16.msra.mxu0 %v387
        %411 = vmatprep.subr.bf16.mxu0 0
        %412 = vmatpush1.bf16.msra.mxu0 %v388
        %413 = vmatprep.subr.bf16.mxu0 0
        %414 = vmatpush1.bf16.msra.mxu0 0
        %415 = vmatprep.subr.bf16.mxu0 0
        %416 = vmatpush1.bf16.msra.mxu0 0
        %417 = vmatprep.subr.bf16.mxu0 0
        %418 = vmatpush1.bf16.msra.mxu0 0
        %419 = vmatprep.subr.bf16.mxu0 0
        %420 = vmatpush1.bf16.msra.mxu0 0
        %421 = vmatprep.subr.bf16.mxu0 0
        %422 = vmatpush1.bf16.msra.mxu0 0
        %423 = vmatprep.subr.bf16.mxu0 0
        %424 = vmatpush1.bf16.msra.mxu0 0
        %425 = vmatprep.subr.bf16.mxu0 0
        %426 = vmatpush1.bf16.msra.mxu0 0
        %427 = vmatprep.subr.bf16.mxu0 0
        %428 = vmatpush1.bf16.msra.mxu0 0
        %429 = vmatprep.mubr.bf16.mxu0 0
        %430 = vmatmul.mubr.bf16.gmra.mrb[0].mxu0 %v225
        %v431 = vpop.f32.mrb[0].mxu0
        %v432 = vadd.f32 %v343, %v431
        %v433 = vpop.f32.mrb[0].mxu0
        %v434 = vpop.f32.mrb[0].mxu0
        %v435 = vadd.f32 %v346, %v434
        %v436 = vpop.f32.mrb[0].mxu0
        %437 = vdwg.mxu0
        %v438 = vrot.slane %v214, 1
        %v439 = vrot.slane %v215, 1
        %v440 = vrot.slane %v216, 1
        %vm441 = vcmp.lt.s32.totalorder %v221, 7
        %v442 = vsel %vm441, %v439, %v440
        %v443 = vsel %vm441, %v438, %v439
        %v444 = vpack.c.bf16 %v442, %v443
        %s445 = scalar_lea.vmem [#allocation6], 128
        %v446 = vld [vmem:[%s445] sm:$0xf]
        %v447 = vld [vmem:[%s445 + $0x4] sm:$0xf]
        %v448 = vld [vmem:[%s445 + $0x8] sm:$0xf]
        %v449 = vld [vmem:[%s445 + $0xc] sm:$0xf]
        %v450 = vld [vmem:[%s445 + $0x10] sm:$0xf]
        %v451 = vld [vmem:[%s445 + $0x14] sm:$0xf]
        %v452 = vld [vmem:[%s445 + $0x18] sm:$0xf]
        %v453 = vld [vmem:[%s445 + $0x1c] sm:$0xf]
        %v454 = vld [vmem:[%s445 + $0x20] sm:$0xf]
        %v455 = vld [vmem:[%s445 + $0x24] sm:$0xf]
        %v456 = vld [vmem:[%s445 + $0x28] sm:$0xf]
        %v457 = vld [vmem:[%s445 + $0x2c] sm:$0xf]
        %v458 = vld [vmem:[%s445 + $0x30] sm:$0xf]
        %v459 = vld [vmem:[%s445 + $0x34] sm:$0xf]
        %v460 = vld [vmem:[%s445 + $0x38] sm:$0xf]
        %v461 = vld [vmem:[%s445 + $0x3c] sm:$0xf]
        %v478 = vunpack.c.l.b16 %v446
        %v479 = vunpack.c.l.b16 %v447
        %v480 = vunpack.c.l.b16 %v448
        %v481 = vunpack.c.l.b16 %v449
        %v482 = vunpack.c.l.b16 %v450
        %v483 = vunpack.c.l.b16 %v451
        %v484 = vunpack.c.l.b16 %v452
        %v485 = vunpack.c.l.b16 %v453
        %v486 = vunpack.c.l.b16 %v454
        %v487 = vunpack.c.l.b16 %v455
        %v488 = vunpack.c.l.b16 %v456
        %v489 = vunpack.c.l.b16 %v457
        %v490 = vunpack.c.l.b16 %v458
        %v491 = vunpack.c.l.b16 %v459
        %v492 = vunpack.c.l.b16 %v460
        %v493 = vunpack.c.l.b16 %v461
        %v494 = vpack.c.b16 %v479, %v478
        %v495 = vpack.c.b16 %v481, %v480
        %v496 = vpack.c.b16 %v483, %v482
        %v497 = vpack.c.b16 %v485, %v484
        %v498 = vpack.c.b16 %v487, %v486
        %v499 = vpack.c.b16 %v489, %v488
        %v500 = vpack.c.b16 %v491, %v490
        %v501 = vpack.c.b16 %v493, %v492
        %510 = vmatprep.subr.bf16.mxu0 0
        %511 = vmatpush1.bf16.msra.mxu0 %v494
        %512 = vmatprep.subr.bf16.mxu0 0
        %513 = vmatpush1.bf16.msra.mxu0 %v495
        %514 = vmatprep.subr.bf16.mxu0 0
        %515 = vmatpush1.bf16.msra.mxu0 %v496
        %516 = vmatprep.subr.bf16.mxu0 0
        %517 = vmatpush1.bf16.msra.mxu0 %v497
        %518 = vmatprep.subr.bf16.mxu0 0
        %519 = vmatpush1.bf16.msra.mxu0 %v498
        %520 = vmatprep.subr.bf16.mxu0 0
        %521 = vmatpush1.bf16.msra.mxu0 %v499
        %522 = vmatprep.subr.bf16.mxu0 0
        %523 = vmatpush1.bf16.msra.mxu0 %v500
        %524 = vmatprep.subr.bf16.mxu0 0
        %525 = vmatpush1.bf16.msra.mxu0 %v501
        %526 = vmatprep.subr.bf16.mxu0 0
        %527 = vmatpush1.bf16.msra.mxu0 0
        %528 = vmatprep.subr.bf16.mxu0 0
        %529 = vmatpush1.bf16.msra.mxu0 0
        %530 = vmatprep.subr.bf16.mxu0 0
        %531 = vmatpush1.bf16.msra.mxu0 0
        %532 = vmatprep.subr.bf16.mxu0 0
        %533 = vmatpush1.bf16.msra.mxu0 0
        %534 = vmatprep.subr.bf16.mxu0 0
        %535 = vmatpush1.bf16.msra.mxu0 0
        %536 = vmatprep.subr.bf16.mxu0 0
        %537 = vmatpush1.bf16.msra.mxu0 0
        %538 = vmatprep.subr.bf16.mxu0 0
        %539 = vmatpush1.bf16.msra.mxu0 0
        %540 = vmatprep.subr.bf16.mxu0 0
        %541 = vmatpush1.bf16.msra.mxu0 0
        %542 = vmatprep.mubr.bf16.mxu0 0
        %543 = vmatmul.mubr.bf16.gmra.mrb[0].mxu0 %v444
        %v544 = vpop.f32.mrb[0].mxu0
        %v545 = vadd.f32 0.0, %v544
        %v546 = vpop.f32.mrb[0].mxu0
        %v547 = vpop.f32.mrb[0].mxu0
        %v548 = vadd.f32 0.0, %v547
        %v549 = vpop.f32.mrb[0].mxu0
        %550 = vdwg.mxu0
        %v551 = vadd.f32 %v432, %v545
        %v552 = vadd.f32 %v435, %v548
        %v553 = vld [vmem:[%s2] sm:$0x1]
        %v555 = vlaneseq
        %v556 = vshrl.u32 %v555, 7
        %v557 = vsub.s32 0, %v556
        %v558 = vrot.slane %v553, %v557
        %v560 = vadd.f32 %v551, %v558
        %v561 = vadd.f32 %v552, %v558
        %v562 = vmax.f32 %v560, 0.0
        %v563 = vmax.f32 %v561, 0.0
        %564 = vst [vmem:[#allocation2 + $0x8] sm:$0xff] %v562
        %565 = vst [vmem:[#allocation2 + $0x10] sm:$0xff] %v563
        %v566 = vld [vmem:[#allocation2] sm:$0xff]
        %v567 = vld [vmem:[#allocation2 + $0x8] sm:$0xff]
        %v568 = vld [vmem:[#allocation2 + $0x10] sm:$0xff]
        %v569 = vld [vmem:[#allocation2 + $0x18] sm:$0xff]
        %v570 = vrot.slane %v566, 7
        %v571 = vrot.slane %v567, 7
        %v572 = vrot.slane %v568, 7
        %v573 = vsel %vm222, %v571, %v572
        %v574 = vsel %vm222, %v570, %v571
        %v575 = vpack.c.bf16 %v573, %v574
        %s576 = scalar_lea.vmem [#allocation6], 192
        %v577 = vld [vmem:[%s576] sm:$0xf]
        %v578 = vld [vmem:[%s576 + $0x4] sm:$0xf]
        %v579 = vld [vmem:[%s576 + $0x8] sm:$0xf]
        %v580 = vld [vmem:[%s576 + $0xc] sm:$0xf]
        %v581 = vld [vmem:[%s576 + $0x10] sm:$0xf]
        %v582 = vld [vmem:[%s576 + $0x14] sm:$0xf]
        %v583 = vld [vmem:[%s576 + $0x18] sm:$0xf]
        %v584 = vld [vmem:[%s576 + $0x1c] sm:$0xf]
        %v585 = vld [vmem:[%s576 + $0x20] sm:$0xf]
        %v586 = vld [vmem:[%s576 + $0x24] sm:$0xf]
        %v587 = vld [vmem:[%s576 + $0x28] sm:$0xf]
        %v588 = vld [vmem:[%s576 + $0x2c] sm:$0xf]
        %v589 = vld [vmem:[%s576 + $0x30] sm:$0xf]
        %v590 = vld [vmem:[%s576 + $0x34] sm:$0xf]
        %v591 = vld [vmem:[%s576 + $0x38] sm:$0xf]
        %v592 = vld [vmem:[%s576 + $0x3c] sm:$0xf]
        %v593 = vpack.c.bf16 %v568, %v567
        %s594 = scalar_lea.vmem [#allocation6], 256
        %v595 = vld [vmem:[%s594] sm:$0xf]
        %v596 = vld [vmem:[%s594 + $0x4] sm:$0xf]
        %v597 = vld [vmem:[%s594 + $0x8] sm:$0xf]
        %v598 = vld [vmem:[%s594 + $0xc] sm:$0xf]
        %v599 = vld [vmem:[%s594 + $0x10] sm:$0xf]
        %v600 = vld [vmem:[%s594 + $0x14] sm:$0xf]
        %v601 = vld [vmem:[%s594 + $0x18] sm:$0xf]
        %v602 = vld [vmem:[%s594 + $0x1c] sm:$0xf]
        %v603 = vld [vmem:[%s594 + $0x20] sm:$0xf]
        %v604 = vld [vmem:[%s594 + $0x24] sm:$0xf]
        %v605 = vld [vmem:[%s594 + $0x28] sm:$0xf]
        %v606 = vld [vmem:[%s594 + $0x2c] sm:$0xf]
        %v607 = vld [vmem:[%s594 + $0x30] sm:$0xf]
        %v608 = vld [vmem:[%s594 + $0x34] sm:$0xf]
        %v609 = vld [vmem:[%s594 + $0x38] sm:$0xf]
        %v610 = vld [vmem:[%s594 + $0x3c] sm:$0xf]
        %v627 = vunpack.c.l.b16 %v595
        %v628 = vunpack.c.l.b16 %v596
        %v629 = vunpack.c.l.b16 %v597
        %v630 = vunpack.c.l.b16 %v598
        %v631 = vunpack.c.l.b16 %v599
        %v632 = vunpack.c.l.b16 %v600
        %v633 = vunpack.c.l.b16 %v601
        %v634 = vunpack.c.l.b16 %v602
        %v635 = vunpack.c.l.b16 %v603
        %v636 = vunpack.c.l.b16 %v604
        %v637 = vunpack.c.l.b16 %v605
        %v638 = vunpack.c.l.b16 %v606
        %v639 = vunpack.c.l.b16 %v607
        %v640 = vunpack.c.l.b16 %v608
        %v641 = vunpack.c.l.b16 %v609
        %v642 = vunpack.c.l.b16 %v610
        %v643 = vpack.c.b16 %v628, %v627
        %v644 = vpack.c.b16 %v630, %v629
        %v645 = vpack.c.b16 %v632, %v631
        %v646 = vpack.c.b16 %v634, %v633
        %v647 = vpack.c.b16 %v636, %v635
        %v648 = vpack.c.b16 %v638, %v637
        %v649 = vpack.c.b16 %v640, %v639
        %v650 = vpack.c.b16 %v642, %v641
        %659 = vmatprep.subr.bf16.mxu0 0
        %660 = vmatpush1.bf16.msra.mxu0 %v643
        %661 = vmatprep.subr.bf16.mxu0 0
        %662 = vmatpush1.bf16.msra.mxu0 %v644
        %663 = vmatprep.subr.bf16.mxu0 0
        %664 = vmatpush1.bf16.msra.mxu0 %v645
        %665 = vmatprep.subr.bf16.mxu0 0
        %666 = vmatpush1.bf16.msra.mxu0 %v646
        %667 = vmatprep.subr.bf16.mxu0 0
        %668 = vmatpush1.bf16.msra.mxu0 %v647
        %669 = vmatprep.subr.bf16.mxu0 0
        %670 = vmatpush1.bf16.msra.mxu0 %v648
        %671 = vmatprep.subr.bf16.mxu0 0
        %672 = vmatpush1.bf16.msra.mxu0 %v649
        %673 = vmatprep.subr.bf16.mxu0 0
        %674 = vmatpush1.bf16.msra.mxu0 %v650
        %675 = vmatprep.subr.bf16.mxu0 0
        %676 = vmatpush1.bf16.msra.mxu0 0
        %677 = vmatprep.subr.bf16.mxu0 0
        %678 = vmatpush1.bf16.msra.mxu0 0
        %679 = vmatprep.subr.bf16.mxu0 0
        %680 = vmatpush1.bf16.msra.mxu0 0
        %681 = vmatprep.subr.bf16.mxu0 0
        %682 = vmatpush1.bf16.msra.mxu0 0
        %683 = vmatprep.subr.bf16.mxu0 0
        %684 = vmatpush1.bf16.msra.mxu0 0
        %685 = vmatprep.subr.bf16.mxu0 0
        %686 = vmatpush1.bf16.msra.mxu0 0
        %687 = vmatprep.subr.bf16.mxu0 0
        %688 = vmatpush1.bf16.msra.mxu0 0
        %689 = vmatprep.subr.bf16.mxu0 0
        %690 = vmatpush1.bf16.msra.mxu0 0
        %691 = vmatprep.mubr.bf16.mxu0 0
        %692 = vmatmul.mubr.bf16.gmra.mrb[0].mxu0 %v593
        %v693 = vpop.f32.mrb[0].mxu0
        %v694 = vadd.f32 0.0, %v693
        %v695 = vpop.f32.mrb[0].mxu0
        %v696 = vpop.f32.mrb[0].mxu0
        %v697 = vadd.f32 0.0, %v696
        %v698 = vpop.f32.mrb[0].mxu0
        %699 = vdwg.mxu0
        %v716 = vunpack.c.l.b16 %v577
        %v717 = vunpack.c.l.b16 %v578
        %v718 = vunpack.c.l.b16 %v579
        %v719 = vunpack.c.l.b16 %v580
        %v720 = vunpack.c.l.b16 %v581
        %v721 = vunpack.c.l.b16 %v582
        %v722 = vunpack.c.l.b16 %v583
        %v723 = vunpack.c.l.b16 %v584
        %v724 = vunpack.c.l.b16 %v585
        %v725 = vunpack.c.l.b16 %v586
        %v726 = vunpack.c.l.b16 %v587
        %v727 = vunpack.c.l.b16 %v588
        %v728 = vunpack.c.l.b16 %v589
        %v729 = vunpack.c.l.b16 %v590
        %v730 = vunpack.c.l.b16 %v591
        %v731 = vunpack.c.l.b16 %v592
        %v732 = vpack.c.b16 %v717, %v716
        %v733 = vpack.c.b16 %v719, %v718
        %v734 = vpack.c.b16 %v721, %v720
        %v735 = vpack.c.b16 %v723, %v722
        %v736 = vpack.c.b16 %v725, %v724
        %v737 = vpack.c.b16 %v727, %v726
        %v738 = vpack.c.b16 %v729, %v728
        %v739 = vpack.c.b16 %v731, %v730
        %748 = vmatprep.subr.bf16.mxu0 0
        %749 = vmatpush1.bf16.msra.mxu0 %v732
        %750 = vmatprep.subr.bf16.mxu0 0
        %751 = vmatpush1.bf16.msra.mxu0 %v733
        %752 = vmatprep.subr.bf16.mxu0 0
        %753 = vmatpush1.bf16.msra.mxu0 %v734
        %754 = vmatprep.subr.bf16.mxu0 0
        %755 = vmatpush1.bf16.msra.mxu0 %v735
        %756 = vmatprep.subr.bf16.mxu0 0
        %757 = vmatpush1.bf16.msra.mxu0 %v736
        %758 = vmatprep.subr.bf16.mxu0 0
        %759 = vmatpush1.bf16.msra.mxu0 %v737
        %760 = vmatprep.subr.bf16.mxu0 0
        %761 = vmatpush1.bf16.msra.mxu0 %v738
        %762 = vmatprep.subr.bf16.mxu0 0
        %763 = vmatpush1.bf16.msra.mxu0 %v739
        %764 = vmatprep.subr.bf16.mxu0 0
        %765 = vmatpush1.bf16.msra.mxu0 0
        %766 = vmatprep.subr.bf16.mxu0 0
        %767 = vmatpush1.bf16.msra.mxu0 0
        %768 = vmatprep.subr.bf16.mxu0 0
        %769 = vmatpush1.bf16.msra.mxu0 0
        %770 = vmatprep.subr.bf16.mxu0 0
        %771 = vmatpush1.bf16.msra.mxu0 0
        %772 = vmatprep.subr.bf16.mxu0 0
        %773 = vmatpush1.bf16.msra.mxu0 0
        %774 = vmatprep.subr.bf16.mxu0 0
        %775 = vmatpush1.bf16.msra.mxu0 0
        %776 = vmatprep.subr.bf16.mxu0 0
        %777 = vmatpush1.bf16.msra.mxu0 0
        %778 = vmatprep.subr.bf16.mxu0 0
        %779 = vmatpush1.bf16.msra.mxu0 0
        %780 = vmatprep.mubr.bf16.mxu0 0
        %781 = vmatmul.mubr.bf16.gmra.mrb[0].mxu0 %v575
        %v782 = vpop.f32.mrb[0].mxu0
        %v783 = vadd.f32 %v694, %v782
        %v784 = vpop.f32.mrb[0].mxu0
        %v785 = vpop.f32.mrb[0].mxu0
        %v786 = vadd.f32 %v697, %v785
        %v787 = vpop.f32.mrb[0].mxu0
        %788 = vdwg.mxu0
        %v789 = vrot.slane %v567, 1
        %v790 = vrot.slane %v568, 1
        %v791 = vrot.slane %v569, 1
        %v792 = vsel %vm441, %v790, %v791
        %v793 = vsel %vm441, %v789, %v790
        %v794 = vpack.c.bf16 %v792, %v793
        %s795 = scalar_lea.vmem [#allocation6], 320
        %v796 = vld [vmem:[%s795] sm:$0xf]
        %v797 = vld [vmem:[%s795 + $0x4] sm:$0xf]
        %v798 = vld [vmem:[%s795 + $0x8] sm:$0xf]
        %v799 = vld [vmem:[%s795 + $0xc] sm:$0xf]
        %v800 = vld [vmem:[%s795 + $0x10] sm:$0xf]
        %v801 = vld [vmem:[%s795 + $0x14] sm:$0xf]
        %v802 = vld [vmem:[%s795 + $0x18] sm:$0xf]
        %v803 = vld [vmem:[%s795 + $0x1c] sm:$0xf]
        %v804 = vld [vmem:[%s795 + $0x20] sm:$0xf]
        %v805 = vld [vmem:[%s795 + $0x24] sm:$0xf]
        %v806 = vld [vmem:[%s795 + $0x28] sm:$0xf]
        %v807 = vld [vmem:[%s795 + $0x2c] sm:$0xf]
        %v808 = vld [vmem:[%s795 + $0x30] sm:$0xf]
        %v809 = vld [vmem:[%s795 + $0x34] sm:$0xf]
        %v810 = vld [vmem:[%s795 + $0x38] sm:$0xf]
        %v811 = vld [vmem:[%s795 + $0x3c] sm:$0xf]
        %v828 = vunpack.c.l.b16 %v796
        %v829 = vunpack.c.l.b16 %v797
        %v830 = vunpack.c.l.b16 %v798
        %v831 = vunpack.c.l.b16 %v799
        %v832 = vunpack.c.l.b16 %v800
        %v833 = vunpack.c.l.b16 %v801
        %v834 = vunpack.c.l.b16 %v802
        %v835 = vunpack.c.l.b16 %v803
        %v836 = vunpack.c.l.b16 %v804
        %v837 = vunpack.c.l.b16 %v805
        %v838 = vunpack.c.l.b16 %v806
        %v839 = vunpack.c.l.b16 %v807
        %v840 = vunpack.c.l.b16 %v808
        %v841 = vunpack.c.l.b16 %v809
        %v842 = vunpack.c.l.b16 %v810
        %v843 = vunpack.c.l.b16 %v811
        %v844 = vpack.c.b16 %v829, %v828
        %v845 = vpack.c.b16 %v831, %v830
        %v846 = vpack.c.b16 %v833, %v832
        %v847 = vpack.c.b16 %v835, %v834
        %v848 = vpack.c.b16 %v837, %v836
        %v849 = vpack.c.b16 %v839, %v838
        %v850 = vpack.c.b16 %v841, %v840
        %v851 = vpack.c.b16 %v843, %v842
        %860 = vmatprep.subr.bf16.mxu0 0
        %861 = vmatpush1.bf16.msra.mxu0 %v844
        %862 = vmatprep.subr.bf16.mxu0 0
        %863 = vmatpush1.bf16.msra.mxu0 %v845
        %864 = vmatprep.subr.bf16.mxu0 0
        %865 = vmatpush1.bf16.msra.mxu0 %v846
        %866 = vmatprep.subr.bf16.mxu0 0
        %867 = vmatpush1.bf16.msra.mxu0 %v847
        %868 = vmatprep.subr.bf16.mxu0 0
        %869 = vmatpush1.bf16.msra.mxu0 %v848
        %870 = vmatprep.subr.bf16.mxu0 0
        %871 = vmatpush1.bf16.msra.mxu0 %v849
        %872 = vmatprep.subr.bf16.mxu0 0
        %873 = vmatpush1.bf16.msra.mxu0 %v850
        %874 = vmatprep.subr.bf16.mxu0 0
        %875 = vmatpush1.bf16.msra.mxu0 %v851
        %876 = vmatprep.subr.bf16.mxu0 0
        %877 = vmatpush1.bf16.msra.mxu0 0
        %878 = vmatprep.subr.bf16.mxu0 0
        %879 = vmatpush1.bf16.msra.mxu0 0
        %880 = vmatprep.subr.bf16.mxu0 0
        %881 = vmatpush1.bf16.msra.mxu0 0
        %882 = vmatprep.subr.bf16.mxu0 0
        %883 = vmatpush1.bf16.msra.mxu0 0
        %884 = vmatprep.subr.bf16.mxu0 0
        %885 = vmatpush1.bf16.msra.mxu0 0
        %886 = vmatprep.subr.bf16.mxu0 0
        %887 = vmatpush1.bf16.msra.mxu0 0
        %888 = vmatprep.subr.bf16.mxu0 0
        %889 = vmatpush1.bf16.msra.mxu0 0
        %890 = vmatprep.subr.bf16.mxu0 0
        %891 = vmatpush1.bf16.msra.mxu0 0
        %892 = vmatprep.mubr.bf16.mxu0 0
        %893 = vmatmul.mubr.bf16.gmra.mrb[0].mxu0 %v794
        %v894 = vpop.f32.mrb[0].mxu0
        %v895 = vadd.f32 0.0, %v894
        %v896 = vpop.f32.mrb[0].mxu0
        %v897 = vpop.f32.mrb[0].mxu0
        %v898 = vadd.f32 0.0, %v897
        %v899 = vpop.f32.mrb[0].mxu0
        %900 = vdwg.mxu0
        %v901 = vadd.f32 %v783, %v895
        %v902 = vadd.f32 %v786, %v898
        %s903 = scalar_lea.vmem %s2, 1
        %v904 = vld [vmem:[%s903] sm:$0x1]
        %v906 = vlaneseq
        %v907 = vshrl.u32 %v906, 7
        %v908 = vsub.s32 0, %v907
        %v909 = vrot.slane %v904, %v908
        %v911 = vadd.f32 %v901, %v909
        %v912 = vadd.f32 %v902, %v909
        %v913 = vmax.f32 %v911, 0.0
        %v914 = vmax.f32 %v912, 0.0
        %915 = vst [vmem:[#allocation2 + $0x8] sm:$0xff] %v913
        %916 = vst [vmem:[#allocation2 + $0x10] sm:$0xff] %v914
        %v917 = vld [vmem:[#allocation2] sm:$0xff]
        %v918 = vld [vmem:[#allocation2 + $0x8] sm:$0xff]
        %v919 = vld [vmem:[#allocation2 + $0x10] sm:$0xff]
        %v920 = vld [vmem:[#allocation2 + $0x18] sm:$0xff]
        %v921 = vrot.slane %v917, 7
        %v922 = vrot.slane %v918, 7
        %v923 = vrot.slane %v919, 7
        %v924 = vsel %vm222, %v922, %v923
        %v925 = vsel %vm222, %v921, %v922
        %v926 = vpack.c.bf16 %v924, %v925
        %s927 = scalar_lea.vmem [#allocation6], 384
        %v928 = vld [vmem:[%s927] sm:$0xf]
        %v929 = vld [vmem:[%s927 + $0x4] sm:$0xf]
        %v930 = vld [vmem:[%s927 + $0x8] sm:$0xf]
        %v931 = vld [vmem:[%s927 + $0xc] sm:$0xf]
        %v932 = vld [vmem:[%s927 + $0x10] sm:$0xf]
        %v933 = vld [vmem:[%s927 + $0x14] sm:$0xf]
        %v934 = vld [vmem:[%s927 + $0x18] sm:$0xf]
        %v935 = vld [vmem:[%s927 + $0x1c] sm:$0xf]
        %v936 = vld [vmem:[%s927 + $0x20] sm:$0xf]
        %v937 = vld [vmem:[%s927 + $0x24] sm:$0xf]
        %v938 = vld [vmem:[%s927 + $0x28] sm:$0xf]
        %v939 = vld [vmem:[%s927 + $0x2c] sm:$0xf]
        %v940 = vld [vmem:[%s927 + $0x30] sm:$0xf]
        %v941 = vld [vmem:[%s927 + $0x34] sm:$0xf]
        %v942 = vld [vmem:[%s927 + $0x38] sm:$0xf]
        %v943 = vld [vmem:[%s927 + $0x3c] sm:$0xf]
        %v944 = vpack.c.bf16 %v919, %v918
        %s945 = scalar_lea.vmem [#allocation6], 448
        %v946 = vld [vmem:[%s945] sm:$0xf]
        %v947 = vld [vmem:[%s945 + $0x4] sm:$0xf]
        %v948 = vld [vmem:[%s945 + $0x8] sm:$0xf]
        %v949 = vld [vmem:[%s945 + $0xc] sm:$0xf]
        %v950 = vld [vmem:[%s945 + $0x10] sm:$0xf]
        %v951 = vld [vmem:[%s945 + $0x14] sm:$0xf]
        %v952 = vld [vmem:[%s945 + $0x18] sm:$0xf]
        %v953 = vld [vmem:[%s945 + $0x1c] sm:$0xf]
        %v954 = vld [vmem:[%s945 + $0x20] sm:$0xf]
        %v955 = vld [vmem:[%s945 + $0x24] sm:$0xf]
        %v956 = vld [vmem:[%s945 + $0x28] sm:$0xf]
        %v957 = vld [vmem:[%s945 + $0x2c] sm:$0xf]
        %v958 = vld [vmem:[%s945 + $0x30] sm:$0xf]
        %v959 = vld [vmem:[%s945 + $0x34] sm:$0xf]
        %v960 = vld [vmem:[%s945 + $0x38] sm:$0xf]
        %v961 = vld [vmem:[%s945 + $0x3c] sm:$0xf]
        %v978 = vunpack.c.l.b16 %v946
        %v979 = vunpack.c.l.b16 %v947
        %v980 = vunpack.c.l.b16 %v948
        %v981 = vunpack.c.l.b16 %v949
        %v982 = vunpack.c.l.b16 %v950
        %v983 = vunpack.c.l.b16 %v951
        %v984 = vunpack.c.l.b16 %v952
        %v985 = vunpack.c.l.b16 %v953
        %v986 = vunpack.c.l.b16 %v954
        %v987 = vunpack.c.l.b16 %v955
        %v988 = vunpack.c.l.b16 %v956
        %v989 = vunpack.c.l.b16 %v957
        %v990 = vunpack.c.l.b16 %v958
        %v991 = vunpack.c.l.b16 %v959
        %v992 = vunpack.c.l.b16 %v960
        %v993 = vunpack.c.l.b16 %v961
        %v994 = vpack.c.b16 %v979, %v978
        %v995 = vpack.c.b16 %v981, %v980
        %v996 = vpack.c.b16 %v983, %v982
        %v997 = vpack.c.b16 %v985, %v984
        %v998 = vpack.c.b16 %v987, %v986
        %v999 = vpack.c.b16 %v989, %v988
        %v1000 = vpack.c.b16 %v991, %v990
        %v1001 = vpack.c.b16 %v993, %v992
        %1010 = vmatprep.subr.bf16.mxu0 0
        %1011 = vmatpush1.bf16.msra.mxu0 %v994
        %1012 = vmatprep.subr.bf16.mxu0 0
        %1013 = vmatpush1.bf16.msra.mxu0 %v995
        %1014 = vmatprep.subr.bf16.mxu0 0
        %1015 = vmatpush1.bf16.msra.mxu0 %v996
        %1016 = vmatprep.subr.bf16.mxu0 0
        %1017 = vmatpush1.bf16.msra.mxu0 %v997
        %1018 = vmatprep.subr.bf16.mxu0 0
        %1019 = vmatpush1.bf16.msra.mxu0 %v998
        %1020 = vmatprep.subr.bf16.mxu0 0
        %1021 = vmatpush1.bf16.msra.mxu0 %v999
        %1022 = vmatprep.subr.bf16.mxu0 0
        %1023 = vmatpush1.bf16.msra.mxu0 %v1000
        %1024 = vmatprep.subr.bf16.mxu0 0
        %1025 = vmatpush1.bf16.msra.mxu0 %v1001
        %1026 = vmatprep.subr.bf16.mxu0 0
        %1027 = vmatpush1.bf16.msra.mxu0 0
        %1028 = vmatprep.subr.bf16.mxu0 0
        %1029 = vmatpush1.bf16.msra.mxu0 0
        %1030 = vmatprep.subr.bf16.mxu0 0
        %1031 = vmatpush1.bf16.msra.mxu0 0
        %1032 = vmatprep.subr.bf16.mxu0 0
        %1033 = vmatpush1.bf16.msra.mxu0 0
        %1034 = vmatprep.subr.bf16.mxu0 0
        %1035 = vmatpush1.bf16.msra.mxu0 0
        %1036 = vmatprep.subr.bf16.mxu0 0
        %1037 = vmatpush1.bf16.msra.mxu0 0
        %1038 = vmatprep.subr.bf16.mxu0 0
        %1039 = vmatpush1.bf16.msra.mxu0 0
        %1040 = vmatprep.subr.bf16.mxu0 0
        %1041 = vmatpush1.bf16.msra.mxu0 0
        %1042 = vmatprep.mubr.bf16.mxu0 0
        %1043 = vmatmul.mubr.bf16.gmra.mrb[0].mxu0 %v944
        %v1044 = vpop.f32.mrb[0].mxu0
        %v1045 = vadd.f32 0.0, %v1044
        %v1046 = vpop.f32.mrb[0].mxu0
        %v1047 = vpop.f32.mrb[0].mxu0
        %v1048 = vadd.f32 0.0, %v1047
        %v1049 = vpop.f32.mrb[0].mxu0
        %1050 = vdwg.mxu0
        %v1067 = vunpack.c.l.b16 %v928
        %v1068 = vunpack.c.l.b16 %v929
        %v1069 = vunpack.c.l.b16 %v930
        %v1070 = vunpack.c.l.b16 %v931
        %v1071 = vunpack.c.l.b16 %v932
        %v1072 = vunpack.c.l.b16 %v933
        %v1073 = vunpack.c.l.b16 %v934
        %v1074 = vunpack.c.l.b16 %v935
        %v1075 = vunpack.c.l.b16 %v936
        %v1076 = vunpack.c.l.b16 %v937
        %v1077 = vunpack.c.l.b16 %v938
        %v1078 = vunpack.c.l.b16 %v939
        %v1079 = vunpack.c.l.b16 %v940
        %v1080 = vunpack.c.l.b16 %v941
        %v1081 = vunpack.c.l.b16 %v942
        %v1082 = vunpack.c.l.b16 %v943
        %v1083 = vpack.c.b16 %v1068, %v1067
        %v1084 = vpack.c.b16 %v1070, %v1069
        %v1085 = vpack.c.b16 %v1072, %v1071
        %v1086 = vpack.c.b16 %v1074, %v1073
        %v1087 = vpack.c.b16 %v1076, %v1075
        %v1088 = vpack.c.b16 %v1078, %v1077
        %v1089 = vpack.c.b16 %v1080, %v1079
        %v1090 = vpack.c.b16 %v1082, %v1081
        %1099 = vmatprep.subr.bf16.mxu0 0
        %1100 = vmatpush1.bf16.msra.mxu0 %v1083
        %1101 = vmatprep.subr.bf16.mxu0 0
        %1102 = vmatpush1.bf16.msra.mxu0 %v1084
        %1103 = vmatprep.subr.bf16.mxu0 0
        %1104 = vmatpush1.bf16.msra.mxu0 %v1085
        %1105 = vmatprep.subr.bf16.mxu0 0
        %1106 = vmatpush1.bf16.msra.mxu0 %v1086
        %1107 = vmatprep.subr.bf16.mxu0 0
        %1108 = vmatpush1.bf16.msra.mxu0 %v1087
        %1109 = vmatprep.subr.bf16.mxu0 0
        %1110 = vmatpush1.bf16.msra.mxu0 %v1088
        %1111 = vmatprep.subr.bf16.mxu0 0
        %1112 = vmatpush1.bf16.msra.mxu0 %v1089
        %1113 = vmatprep.subr.bf16.mxu0 0
        %1114 = vmatpush1.bf16.msra.mxu0 %v1090
        %1115 = vmatprep.subr.bf16.mxu0 0
        %1116 = vmatpush1.bf16.msra.mxu0 0
        %1117 = vmatprep.subr.bf16.mxu0 0
        %1118 = vmatpush1.bf16.msra.mxu0 0
        %1119 = vmatprep.subr.bf16.mxu0 0
        %1120 = vmatpush1.bf16.msra.mxu0 0
        %1121 = vmatprep.subr.bf16.mxu0 0
        %1122 = vmatpush1.bf16.msra.mxu0 0
        %1123 = vmatprep.subr.bf16.mxu0 0
        %1124 = vmatpush1.bf16.msra.mxu0 0
        %1125 = vmatprep.subr.bf16.mxu0 0
        %1126 = vmatpush1.bf16.msra.mxu0 0
        %1127 = vmatprep.subr.bf16.mxu0 0
        %1128 = vmatpush1.bf16.msra.mxu0 0
        %1129 = vmatprep.subr.bf16.mxu0 0
        %1130 = vmatpush1.bf16.msra.mxu0 0
        %1131 = vmatprep.mubr.bf16.mxu0 0
        %1132 = vmatmul.mubr.bf16.gmra.mrb[0].mxu0 %v926
        %v1133 = vpop.f32.mrb[0].mxu0
        %v1134 = vadd.f32 %v1045, %v1133
        %v1135 = vpop.f32.mrb[0].mxu0
        %v1136 = vpop.f32.mrb[0].mxu0
        %v1137 = vadd.f32 %v1048, %v1136
        %v1138 = vpop.f32.mrb[0].mxu0
        %1139 = vdwg.mxu0
        %v1140 = vrot.slane %v918, 1
        %v1141 = vrot.slane %v919, 1
        %v1142 = vrot.slane %v920, 1
        %v1143 = vsel %vm441, %v1141, %v1142
        %v1144 = vsel %vm441, %v1140, %v1141
        %v1145 = vpack.c.bf16 %v1143, %v1144
        %s1146 = scalar_lea.vmem [#allocation6], 512
        %v1147 = vld [vmem:[%s1146] sm:$0xf]
        %v1148 = vld [vmem:[%s1146 + $0x4] sm:$0xf]
        %v1149 = vld [vmem:[%s1146 + $0x8] sm:$0xf]
        %v1150 = vld [vmem:[%s1146 + $0xc] sm:$0xf]
        %v1151 = vld [vmem:[%s1146 + $0x10] sm:$0xf]
        %v1152 = vld [vmem:[%s1146 + $0x14] sm:$0xf]
        %v1153 = vld [vmem:[%s1146 + $0x18] sm:$0xf]
        %v1154 = vld [vmem:[%s1146 + $0x1c] sm:$0xf]
        %v1155 = vld [vmem:[%s1146 + $0x20] sm:$0xf]
        %v1156 = vld [vmem:[%s1146 + $0x24] sm:$0xf]
        %v1157 = vld [vmem:[%s1146 + $0x28] sm:$0xf]
        %v1158 = vld [vmem:[%s1146 + $0x2c] sm:$0xf]
        %v1159 = vld [vmem:[%s1146 + $0x30] sm:$0xf]
        %v1160 = vld [vmem:[%s1146 + $0x34] sm:$0xf]
        %v1161 = vld [vmem:[%s1146 + $0x38] sm:$0xf]
        %v1162 = vld [vmem:[%s1146 + $0x3c] sm:$0xf]
        %v1179 = vunpack.c.l.b16 %v1147
        %v1180 = vunpack.c.l.b16 %v1148
        %v1181 = vunpack.c.l.b16 %v1149
        %v1182 = vunpack.c.l.b16 %v1150
        %v1183 = vunpack.c.l.b16 %v1151
        %v1184 = vunpack.c.l.b16 %v1152
        %v1185 = vunpack.c.l.b16 %v1153
        %v1186 = vunpack.c.l.b16 %v1154
        %v1187 = vunpack.c.l.b16 %v1155
        %v1188 = vunpack.c.l.b16 %v1156
        %v1189 = vunpack.c.l.b16 %v1157
        %v1190 = vunpack.c.l.b16 %v1158
        %v1191 = vunpack.c.l.b16 %v1159
        %v1192 = vunpack.c.l.b16 %v1160
        %v1193 = vunpack.c.l.b16 %v1161
        %v1194 = vunpack.c.l.b16 %v1162
        %v1195 = vpack.c.b16 %v1180, %v1179
        %v1196 = vpack.c.b16 %v1182, %v1181
        %v1197 = vpack.c.b16 %v1184, %v1183
        %v1198 = vpack.c.b16 %v1186, %v1185
        %v1199 = vpack.c.b16 %v1188, %v1187
        %v1200 = vpack.c.b16 %v1190, %v1189
        %v1201 = vpack.c.b16 %v1192, %v1191
        %v1202 = vpack.c.b16 %v1194, %v1193
        %1211 = vmatprep.subr.bf16.mxu0 0
        %1212 = vmatpush1.bf16.msra.mxu0 %v1195
        %1213 = vmatprep.subr.bf16.mxu0 0
        %1214 = vmatpush1.bf16.msra.mxu0 %v1196
        %1215 = vmatprep.subr.bf16.mxu0 0
        %1216 = vmatpush1.bf16.msra.mxu0 %v1197
        %1217 = vmatprep.subr.bf16.mxu0 0
        %1218 = vmatpush1.bf16.msra.mxu0 %v1198
        %1219 = vmatprep.subr.bf16.mxu0 0
        %1220 = vmatpush1.bf16.msra.mxu0 %v1199
        %1221 = vmatprep.subr.bf16.mxu0 0
        %1222 = vmatpush1.bf16.msra.mxu0 %v1200
        %1223 = vmatprep.subr.bf16.mxu0 0
        %1224 = vmatpush1.bf16.msra.mxu0 %v1201
        %1225 = vmatprep.subr.bf16.mxu0 0
        %1226 = vmatpush1.bf16.msra.mxu0 %v1202
        %1227 = vmatprep.subr.bf16.mxu0 0
        %1228 = vmatpush1.bf16.msra.mxu0 0
        %1229 = vmatprep.subr.bf16.mxu0 0
        %1230 = vmatpush1.bf16.msra.mxu0 0
        %1231 = vmatprep.subr.bf16.mxu0 0
        %1232 = vmatpush1.bf16.msra.mxu0 0
        %1233 = vmatprep.subr.bf16.mxu0 0
        %1234 = vmatpush1.bf16.msra.mxu0 0
        %1235 = vmatprep.subr.bf16.mxu0 0
        %1236 = vmatpush1.bf16.msra.mxu0 0
        %1237 = vmatprep.subr.bf16.mxu0 0
        %1238 = vmatpush1.bf16.msra.mxu0 0
        %1239 = vmatprep.subr.bf16.mxu0 0
        %1240 = vmatpush1.bf16.msra.mxu0 0
        %1241 = vmatprep.subr.bf16.mxu0 0
        %1242 = vmatpush1.bf16.msra.mxu0 0
        %1243 = vmatprep.mubr.bf16.mxu0 0
        %1244 = vmatmul.mubr.bf16.gmra.mrb[0].mxu0 %v1145
        %v1245 = vpop.f32.mrb[0].mxu0
        %v1246 = vadd.f32 0.0, %v1245
        %v1247 = vpop.f32.mrb[0].mxu0
        %v1248 = vpop.f32.mrb[0].mxu0
        %v1249 = vadd.f32 0.0, %v1248
        %v1250 = vpop.f32.mrb[0].mxu0
        %1251 = vdwg.mxu0
        %v1252 = vadd.f32 %v1134, %v1246
        %v1253 = vadd.f32 %v1137, %v1249
        %s1254 = scalar_lea.vmem %s2, 2
        %v1255 = vld [vmem:[%s1254] sm:$0x1]
        %v1257 = vlaneseq
        %v1258 = vshrl.u32 %v1257, 7
        %v1259 = vsub.s32 0, %v1258
        %v1260 = vrot.slane %v1255, %v1259
        %v1262 = vadd.f32 %v1252, %v1260
        %v1263 = vadd.f32 %v1253, %v1260
        %v1264 = vmax.f32 %v1262, 0.0
        %v1265 = vmax.f32 %v1263, 0.0
        %v1266 = vpack.c.bf16 %v1265, %v1264
        %v1268 = vunpack.c.l.b16 %v1266
        %v1269 = vunpack.c.h.b16 %v1266
        %v1270 = vpack.c.b16 %v1268, %v1268
        %v1271 = vpack.c.b16 %v1269, %v1269
        %1274 = vst [vmem:[%s203] sm:$0xf] %v1270
        %1275 = vst [vmem:[%s203 + $0x4] sm:$0xf] %v1271
        %s1276 = sand.u32 %s97, 1
        %s1277 = scalar_lea.sflag [#allocation5], %s1276
        %s1278 = sand.u32 %s97, 1
        %s1279 = smul.addr %s1278, 8
        %s1280 = scalar_lea.vmem [#allocation8], %s1279
        // Predicated region
        $region41: #{tpu_custom_call.1} parent=31 // pred_check
          %p1281 = pneg %p107
        $region42: #{tpu_custom_call.1} parent=31 // pred_check_branch
          %1283 = sbr.rel (%p1281) target = $region44
        $region43: #{tpu_custom_call.1} parent=31 // pred_region
          %s1285 = ssub.s32 128, 128
          %1286 = vsyncadd %s1277, %s1285
          %s1287 = smul.addr %s21, 2
          %s1288 = smul.addr %s1287, 64
          %s1289 = scalar_lea.hbm %s3, %s1288
          %s1290 = sshll.u32 %s1280, 4
          %s1291 = int_to_ptr.vmem [resolvable:$true] %s1290
          %1296 = dma.vmem_to_hbm [thread:$0]  %s1291, 128, %s1289, %s1277, 64, 64, 4
        $region44: #{tpu_custom_call.1} parent=31 // pred_fallthru
          _
      $region32: #{tpu_custom_call.1} parent=5 // pred_fallthru
        _
      %p1297 = scmp.le.s32.totalorder 2, %s16
      // Predicated region
      $region45: #{tpu_custom_call.1} parent=5 // pred_check
        %p1298 = pneg %p1297
      $region46: #{tpu_custom_call.1} parent=5 // pred_check_branch
        %1300 = sbr.rel (%p1298) target = $region48
      $region47: #{tpu_custom_call.1} parent=5 // pred_region
        %s1301 = ssub.s32 %s16, 2
        // Predicated region
        $region49: #{tpu_custom_call.1} parent=47 // pred_check
          %p1302 = pneg %p113
        $region50: #{tpu_custom_call.1} parent=47 // pred_check_branch
          %1304 = sbr.rel (%p1302) target = $region52
        $region51: #{tpu_custom_call.1} parent=47 // pred_region
          %s1305 = sand.u32 %s98, 1
          %s1306 = scalar_lea.sflag [#allocation5], %s1305
          %s1307 = sand.u32 %s98, 1
          %s1308 = smul.addr %s1307, 8
          %s1309 = scalar_lea.vmem [#allocation8], %s1308
          %1310 = dma.done %s1306, 128
        $region52: #{tpu_custom_call.1} parent=47 // pred_fallthru
          _
      $region48: #{tpu_custom_call.1} parent=5 // pred_fallthru
        _
    $region6: #{tpu_custom_call.1} parent=1 // loop_footer
      %s20 = sadd.s32 1, %s16
    $region7: #{tpu_custom_call.1} parent=1 // loop_footer_branch
      %15 = sbr.rel target = $region3
    $region8: #{tpu_custom_call.1} parent=1 // loop_exit
      _
    %1311 = vsyncpa [#allocation4], 1
    %s1312 = scalar_lea.sflag [#allocation4], 1
    %1313 = vsyncpa %s1312, 1
    %1314 = vsyncpa [#allocation7], 1
    %1315 = vsyncpa [#allocation5], 1
    %s1316 = scalar_lea.sflag [#allocation5], 1
    %1317 = vsyncpa %s1316, 1

</llo_original>
